<compile_context>
chip_gen: v6e
topology: v6e:2x2x1
jax: 0.10.0
libtpu: 0.0.40
codegen_flags: <defaults>
</compile_context>

<pallas_src>
import functools
import numpy as np
import jax
import jax.numpy as jnp
from jax.experimental import pallas as pl
from jax.experimental.pallas import tpu as pltpu

DIM_HIDDEN = 128   # matches the PyTorch module default; lane-dense (128 lanes)
NUM_ROUNDS = 1


def _spec1(shape):  # full-array block, 1-D grid
    nd = len(shape)
    return pl.BlockSpec(shape, lambda i, _nd=nd: (0,) * _nd)


def _spec_inv(shape):  # full-array block, 2-D grid, loop-invariant -> 1 buffer
    nd = len(shape)
    return pl.BlockSpec(shape, lambda r, l, _nd=nd: (0,) * _nd,
                        pipeline_mode=pl.Buffered(1))


# --------------------------------------------------------------- encoder kernel
# One-shot, three wide dots:
#   [s|t] = onehot @ [ews|ewt];  hs = [s|t] @ W_hs;  hs_part = hs @ [W1hs_and|W1hs_not]
def _encoder_kernel(onehot_ref, encw_ref, encb_ref, hsw_ref, hsb_ref,
                    w1hs_ref, b1_ref, hs_ref, hspart_ref):
    st = (jnp.dot(onehot_ref[...], encw_ref[...],
                  preferred_element_type=jnp.float32) + encb_ref[...])        # (N, 2H)
    hs = (jnp.dot(st, hsw_ref[...], preferred_element_type=jnp.float32)
          + hsb_ref[...])                                                     # (N, H)
    hs_ref[...] = hs
    # Loop-invariant hs-half (incl. bias) of the aggregator layer-1 for both
    # gate types, lane-packed [and | not]; stored bf16 to halve resident VMEM.
    hspart_ref[...] = (jnp.dot(hs, w1hs_ref[...],
                               preferred_element_type=jnp.float32)
                       + b1_ref[...]).astype(jnp.bfloat16)


# ----------------------------------------------------------- fused level kernel
# grid = (num_rounds, num_layers_f - 1); hf lives in the resident output block.
def _level_kernel(fl_ref, gt_ref, adj_ref, hspart_ref,
                  w1hf_ref, w2_ref, b2_ref, w3_ref, b3_ref,
                  wih_ref, bih_ref, whh_ref, bhh_ref,
                  hf_ref, *, hidden):
    h = hidden

    @pl.when((pl.program_id(0) == 0) & (pl.program_id(1) == 0))
    def _():
        hf_ref[...] = jnp.zeros_like(hf_ref)

    level = pl.program_id(1) + 1
    hf_old = hf_ref[...]                       # (N, H) f32, resident accumulator
    hf_b16 = hf_old.astype(jnp.bfloat16)
    fl = fl_ref[...]                           # (N, 1) int32 forward_level
    gt = gt_ref[...]                           # (N, 1) int32 gate type

    # ---- aggregator MLP; layer-1 hf-half fused across gate types (256-wide) --
    h1 = jnp.maximum(
        hspart_ref[...].astype(jnp.float32)
        + jnp.dot(hf_b16, w1hf_ref[...], preferred_element_type=jnp.float32),
        0.0)                                   # (N, 2H) = [and | not]

    def mlp_tail(g, h1_g):
        h2 = jnp.maximum(
            jnp.dot(h1_g.astype(jnp.bfloat16), w2_ref[g],
                    preferred_element_type=jnp.float32) + b2_ref[g], 0.0)
        return (jnp.dot(h2.astype(jnp.bfloat16), w3_ref[g],
                        preferred_element_type=jnp.float32) + b3_ref[g])

    mlp = jnp.concatenate([mlp_tail(0, h1[:, :h]),
                           mlp_tail(1, h1[:, h:])],
                          axis=-1).astype(jnp.bfloat16)          # (N, 2H)

    # ---- sum aggregation: ONE pass over adj for both gate types -------------
    # TODO(synk): tile over dst-row slabs with adj kept in HBM for large graphs.
    msg = jnp.dot(adj_ref[...], mlp, preferred_element_type=jnp.float32)  # (N, 2H)

    # ---- single-step GRUs, gates lane-packed [r|z|n]; hidden-side fused ------
    gh = (jnp.dot(hf_b16, whh_ref[...], preferred_element_type=jnp.float32)
          + bhh_ref[...])                                        # (N, 6H) = [and | not]

    def gru(g, msg_g, gh_g):
        gi = (jnp.dot(msg_g.astype(jnp.bfloat16), wih_ref[g],
                      preferred_element_type=jnp.float32) + bih_ref[g])
        rz = jax.nn.sigmoid(gi[:, :2 * h] + gh_g[:, :2 * h])     # one wide sigmoid
        r, z = rz[:, :h], rz[:, h:]
        n = jnp.tanh(gi[:, 2 * h:] + r * gh_g[:, 2 * h:])
        return (1.0 - z) * n + z * hf_old

    h_and = gru(0, msg[:, :h], gh[:, :3 * h])
    h_not = gru(1, msg[:, h:], gh[:, 3 * h:])

    # ---- dst-mask selection: two nested selects on disjoint boolean masks ----
    upd = fl == level
    hf_ref[...] = jnp.where(upd & (gt == 1), h_and,
                            jnp.where(upd & (gt == 2), h_not, hf_old))


# ------------------------------------------------------------------ parameters
def init_params(key, h=DIM_HIDDEN):
    keys = iter(jax.random.split(key, 32))

    def w(shape, scale=0.1, dtype=jnp.float32):
        return (scale * jax.random.normal(next(keys), shape, jnp.float32)).astype(dtype)

    bf = jnp.bfloat16
    p = {}
    # TODO(synk): struct_encoder is an injected dependency in the original model;
    # modeled here as one linear projection of the 6-class one-hot gate code with
    # the s- and t-halves lane-packed.
    p["enc_w"], p["enc_b"] = w((6, 2 * h)), w((1, 2 * h))
    # hs_linear: Linear(2H -> H)
    p["hs_w"], p["hs_b"] = w((2 * h, h)), w((1, h))
    # TFMlpAggr(2H -> H) per gate type; first-layer weight split into the
    # hs-half (f32, used once in the encoder) and hf-half (bf16), both
    # lane-packed [and | not].
    p["aggr_w1_hs"], p["aggr_b1"] = w((h, 2 * h)), w((1, 2 * h))
    p["aggr_w1_hf"] = w((h, 2 * h), dtype=bf)
    p["aggr_w2"], p["aggr_b2"] = w((2, h, h), dtype=bf), w((2, 1, h))
    p["aggr_w3"], p["aggr_b3"] = w((2, h, h), dtype=bf), w((2, 1, h))
    # nn.GRU(H, H) per gate type; gates packed [r|z|n] along the lane dim.
    # Input-side weights stay per-gate (different LHS); hidden-side weights are
    # lane-packed [and | not] since the LHS (hf) is shared.
    p["gru_wih"], p["gru_bih"] = w((2, h, 3 * h), dtype=bf), w((2, 1, 3 * h))
    p["gru_whh"], p["gru_bhh"] = w((h, 6 * h), dtype=bf), w((1, 6 * h))
    return p


# --------------------------------------------------------------------- forward
def model_forward(params, x, edge_index, forward_level, gate, *,
                  num_layers_f, dim_hidden=DIM_HIDDEN, num_rounds=NUM_ROUNDS):
    n = x.shape[0]
    h = dim_hidden
    n_pad = ((n + 15) // 16) * 16          # sublane-align node rows (bf16 tile = 16)

    one_hot = jax.nn.one_hot(x[:, 1], 6, dtype=jnp.float32)
    one_hot = jnp.pad(one_hot, ((0, n_pad - n), (0, 0)))
    fl = jnp.pad(forward_level.astype(jnp.int32), (0, n_pad - n),
                 constant_values=-1)[:, None]
    gt = jnp.pad(gate[:, 0].astype(jnp.int32), (0, n_pad - n),
                 constant_values=-1)[:, None]

    # Dense adjacency: adj[dst, src] = multiplicity of edge src->dst (bf16 operand;
    # exact for AIG fan-in-2 graphs).
    src, dst = edge_index[0], edge_index[1]
    adj = (jnp.zeros((n_pad, n_pad), jnp.float32).at[dst, src].add(1.0)
           ).astype(jnp.bfloat16)

    # ---- encoder + loop-invariant hs-half of the aggregator layer-1 (one call)
    hs_pad, hs_part = pl.pallas_call(
        _encoder_kernel,
        out_shape=(jax.ShapeDtypeStruct((n_pad, h), jnp.float32),
                   jax.ShapeDtypeStruct((n_pad, 2 * h), jnp.bfloat16)),
        grid=(1,),
        in_specs=[_spec1(s) for s in ((n_pad, 6), (6, 2 * h), (1, 2 * h),
                                      (2 * h, h), (1, h), (h, 2 * h), (1, 2 * h))],
        out_specs=(_spec1((n_pad, h)), _spec1((n_pad, 2 * h))),
        compiler_params=pltpu.CompilerParams(dimension_semantics=("arbitrary",)),
    )(one_hot, params["enc_w"], params["enc_b"], params["hs_w"], params["hs_b"],
      params["aggr_w1_hs"], params["aggr_b1"])

    if num_layers_f <= 1 or num_rounds <= 0:
        return hs_pad[:n], jnp.zeros((n, h), jnp.float32)

    # ---- fused message-passing loop: one pallas_call, grid = (rounds, levels-1)
    in_arrays = (fl, gt, adj, hs_part,
                 params["aggr_w1_hf"], params["aggr_w2"], params["aggr_b2"],
                 params["aggr_w3"], params["aggr_b3"],
                 params["gru_wih"], params["gru_bih"],
                 params["gru_whh"], params["gru_bhh"])

    # Explicit VMEM budget: inputs (single-buffered) + resident hf block +
    # generous f32 temporary headroom; clamp to [32, 56] MiB so the request is
    # deliberate on v5e/v6e and still below v7x's 64 MiB physical VMEM.
    in_bytes = sum(int(np.prod(a.shape)) * a.dtype.itemsize for a in in_arrays)
    out_bytes = n_pad * h * 4
    tmp_bytes = n_pad * 24 * h * 4
    vmem_budget = int(min(max(2 * in_bytes + 2 * out_bytes + tmp_bytes + (2 << 20),
                              32 << 20), 56 << 20))

    hf_pad = pl.pallas_call(
        functools.partial(_level_kernel, hidden=h),
        out_shape=jax.ShapeDtypeStruct((n_pad, h), jnp.float32),
        grid=(num_rounds, num_layers_f - 1),
        in_specs=[_spec_inv(a.shape) for a in in_arrays],
        out_specs=pl.BlockSpec((n_pad, h), lambda r, l: (0, 0)),
        compiler_params=pltpu.CompilerParams(
            dimension_semantics=("arbitrary", "arbitrary"),
            vmem_limit_bytes=vmem_budget),
    )(*in_arrays)

    return hs_pad[:n], hf_pad[:n]


# ------------------------------------------------------------------------ main
if __name__ == "__main__":
    key = jax.random.PRNGKey(0)
    params = init_params(key)

    # Small deterministic AIG: 4 PIs (level 0), 4 gates at level 1, 4 at level 2.
    gate_np = np.array([0, 0, 0, 0, 1, 1, 2, 2, 1, 1, 2, 2], dtype=np.int32)
    forward_level_np = np.array([0, 0, 0, 0, 1, 1, 1, 1, 2, 2, 2, 2], dtype=np.int32)
    edges_np = np.array([(0, 4), (1, 4), (2, 5), (3, 5), (0, 6), (3, 7),
                         (4, 8), (6, 8), (5, 9), (7, 9), (6, 10), (7, 11)],
                        dtype=np.int32).T                    # (2, E): row0=src, row1=dst
    n_nodes = gate_np.shape[0]
    x_np = np.stack([np.arange(n_nodes, dtype=np.int32), gate_np], axis=1)  # x[:,1]=gate
    num_layers_f = int(forward_level_np.max()) + 1

    fwd = jax.jit(functools.partial(model_forward,
                                    num_layers_f=num_layers_f,
                                    dim_hidden=DIM_HIDDEN,
                                    num_rounds=NUM_ROUNDS))
    hs, hf = fwd(params,
                 jnp.asarray(x_np),
                 jnp.asarray(edges_np),
                 jnp.asarray(forward_level_np),
                 jnp.asarray(gate_np)[:, None])
    jax.block_until_ready((hs, hf))
    assert hs.shape == (n_nodes, DIM_HIDDEN) and hf.shape == (n_nodes, DIM_HIDDEN)
    assert bool(jnp.all(jnp.isfinite(hs))) and bool(jnp.all(jnp.isfinite(hf)))
    print("KERNEL_OK")
</pallas_src>

<mosaic_0001>
module attributes {stable_mosaic.version = 11 : i64} {
  func.func @_level_kernel(%arg0: i32, %arg1: i32, %arg2: memref<16x1xi32, #tpu.memory_space<vmem>>, %arg3: memref<16x1xi32, #tpu.memory_space<vmem>>, %arg4: memref<16x16xbf16, #tpu.memory_space<vmem>>, %arg5: memref<16x256xbf16, #tpu.memory_space<vmem>>, %arg6: memref<128x256xbf16, #tpu.memory_space<vmem>>, %arg7: memref<2x128x128xbf16, #tpu.memory_space<vmem>>, %arg8: memref<2x1x128xf32, #tpu.memory_space<vmem>>, %arg9: memref<2x128x128xbf16, #tpu.memory_space<vmem>>, %arg10: memref<2x1x128xf32, #tpu.memory_space<vmem>>, %arg11: memref<2x128x384xbf16, #tpu.memory_space<vmem>>, %arg12: memref<2x1x384xf32, #tpu.memory_space<vmem>>, %arg13: memref<128x768xbf16, #tpu.memory_space<vmem>>, %arg14: memref<1x768xf32, #tpu.memory_space<vmem>>, %arg15: memref<16x128xf32, #tpu.memory_space<vmem>>) attributes {dimension_semantics = [#tpu.dimension_semantics<arbitrary>, #tpu.dimension_semantics<arbitrary>], iteration_bounds = array<i64: 1, 2>, scalar_prefetch = 0 : i64, scratch_operands = 0 : i64, tpu.core_type = #tpu.core_type<tc>, window_params = [{pipeline_mode = #tpu.pipeline_mode<synchronous>, transform_indices = @transform_0, window_bounds = array<i64: 16, 1>}, {pipeline_mode = #tpu.pipeline_mode<synchronous>, transform_indices = @transform_1, window_bounds = array<i64: 16, 1>}, {pipeline_mode = #tpu.pipeline_mode<synchronous>, transform_indices = @transform_2, window_bounds = array<i64: 16, 16>}, {pipeline_mode = #tpu.pipeline_mode<synchronous>, transform_indices = @transform_3, window_bounds = array<i64: 16, 256>}, {pipeline_mode = #tpu.pipeline_mode<synchronous>, transform_indices = @transform_4, window_bounds = array<i64: 128, 256>}, {pipeline_mode = #tpu.pipeline_mode<synchronous>, transform_indices = @transform_5, window_bounds = array<i64: 2, 128, 128>}, {pipeline_mode = #tpu.pipeline_mode<synchronous>, transform_indices = @transform_6, window_bounds = array<i64: 2, 1, 128>}, {pipeline_mode = #tpu.pipeline_mode<synchronous>, transform_indices = @transform_7, window_bounds = array<i64: 2, 128, 128>}, {pipeline_mode = #tpu.pipeline_mode<synchronous>, transform_indices = @transform_8, window_bounds = array<i64: 2, 1, 128>}, {pipeline_mode = #tpu.pipeline_mode<synchronous>, transform_indices = @transform_9, window_bounds = array<i64: 2, 128, 384>}, {pipeline_mode = #tpu.pipeline_mode<synchronous>, transform_indices = @transform_10, window_bounds = array<i64: 2, 1, 384>}, {pipeline_mode = #tpu.pipeline_mode<synchronous>, transform_indices = @transform_11, window_bounds = array<i64: 128, 768>}, {pipeline_mode = #tpu.pipeline_mode<synchronous>, transform_indices = @transform_12, window_bounds = array<i64: 1, 768>}, {pipeline_mode = #tpu.pipeline_mode<synchronous>, transform_indices = @transform_13, window_bounds = array<i64: 16, 128>}]} {
    %c0_i32 = arith.constant 0 : i32
    %0 = arith.cmpi eq, %arg0, %c0_i32 : i32
    %c0_i32_0 = arith.constant 0 : i32
    %1 = arith.cmpi eq, %arg1, %c0_i32_0 : i32
    %2 = arith.andi %0, %1 : i1
    %3 = arith.extui %2 : i1 to i32
    %c0_i32_1 = arith.constant 0 : i32
    %4 = arith.cmpi ne, %3, %c0_i32_1 : i32
    scf.if %4 {
      %cst_70 = arith.constant 0.000000e+00 : f32
      %139 = vector.broadcast %cst_70 : f32 to vector<16x128xf32>
      %c0_71 = arith.constant 0 : index
      %c0_72 = arith.constant 0 : index
      %140 = vector.load %arg15[%c0_71, %c0_72] : memref<16x128xf32, #tpu.memory_space<vmem>>, vector<16x128xf32>
      tpu.vector_store %arg15[%c0_71, %c0_72], %139 {strides = array<i32>} : memref<16x128xf32, #tpu.memory_space<vmem>>, vector<16x128xf32>,
    } else {
    }
    %c1_i32 = arith.constant 1 : i32
    %5 = arith.addi %arg1, %c1_i32 : i32
    %c0 = arith.constant 0 : index
    %c0_2 = arith.constant 0 : index
    %6 = vector.load %arg15[%c0, %c0_2] : memref<16x128xf32, #tpu.memory_space<vmem>>, vector<16x128xf32>
    %7 = arith.truncf %6 : vector<16x128xf32> to vector<16x128xbf16>
    %c0_3 = arith.constant 0 : index
    %c0_4 = arith.constant 0 : index
    %8 = vector.load %arg2[%c0_3, %c0_4] : memref<16x1xi32, #tpu.memory_space<vmem>>, vector<16x1xi32>
    %c0_5 = arith.constant 0 : index
    %c0_6 = arith.constant 0 : index
    %9 = vector.load %arg3[%c0_5, %c0_6] : memref<16x1xi32, #tpu.memory_space<vmem>>, vector<16x1xi32>
    %c0_7 = arith.constant 0 : index
    %c0_8 = arith.constant 0 : index
    %10 = vector.load %arg5[%c0_7, %c0_8] : memref<16x256xbf16, #tpu.memory_space<vmem>>, vector<16x256xbf16>
    %11 = arith.extf %10 : vector<16x256xbf16> to vector<16x256xf32>
    %c0_9 = arith.constant 0 : index
    %c0_10 = arith.constant 0 : index
    %12 = vector.load %arg6[%c0_9, %c0_10] : memref<128x256xbf16, #tpu.memory_space<vmem>>, vector<128x256xbf16>
    %cst = arith.constant dense<0.000000e+00> : vector<16x256xf32>
    %13 = tpu.matmul %7, %12, %cst {dimension_numbers = #tpu.dot_dimension_numbers<[1], [0], [0], [1], [0, 0, 1, 1], [], []>} : vector<16x128xbf16>, vector<128x256xbf16>, vector<16x256xf32> -> vector<16x256xf32>
    %14 = arith.addf %11, %13 : vector<16x256xf32>
    %cst_11 = arith.constant 0.000000e+00 : f32
    %15 = vector.broadcast %cst_11 : f32 to vector<16x256xf32>
    %16 = arith.maximumf %14, %15 : vector<16x256xf32>
    %17 = vector.extract_strided_slice %16 {offsets = [0, 0], sizes = [16, 128], strides = [1, 1]} : vector<16x256xf32> to vector<16x128xf32>
    %18 = arith.truncf %17 : vector<16x128xf32> to vector<16x128xbf16>
    %c0_12 = arith.constant 0 : index
    %c0_13 = arith.constant 0 : index
    %c0_14 = arith.constant 0 : index
    %19 = vector.load %arg7[%c0_12, %c0_13, %c0_14] : memref<2x128x128xbf16, #tpu.memory_space<vmem>>, vector<1x128x128xbf16>
    %20 = vector.shape_cast %19 : vector<1x128x128xbf16> to vector<128x128xbf16>
    %cst_15 = arith.constant dense<0.000000e+00> : vector<16x128xf32>
    %21 = tpu.matmul %18, %20, %cst_15 {dimension_numbers = #tpu.dot_dimension_numbers<[1], [0], [0], [1], [0, 0, 1, 1], [], []>} : vector<16x128xbf16>, vector<128x128xbf16>, vector<16x128xf32> -> vector<16x128xf32>
    %c0_16 = arith.constant 0 : index
    %c0_17 = arith.constant 0 : index
    %c0_18 = arith.constant 0 : index
    %22 = vector.load %arg8[%c0_16, %c0_17, %c0_18] : memref<2x1x128xf32, #tpu.memory_space<vmem>>, vector<1x1x128xf32>
    %23 = vector.shape_cast %22 : vector<1x1x128xf32> to vector<1x128xf32>
    %24 = vector.broadcast %23 : vector<1x128xf32> to vector<16x128xf32>
    %25 = arith.addf %21, %24 : vector<16x128xf32>
    %cst_19 = arith.constant 0.000000e+00 : f32
    %26 = vector.broadcast %cst_19 : f32 to vector<16x128xf32>
    %27 = arith.maximumf %25, %26 : vector<16x128xf32>
    %28 = arith.truncf %27 : vector<16x128xf32> to vector<16x128xbf16>
    %c0_20 = arith.constant 0 : index
    %c0_21 = arith.constant 0 : index
    %c0_22 = arith.constant 0 : index
    %29 = vector.load %arg9[%c0_20, %c0_21, %c0_22] : memref<2x128x128xbf16, #tpu.memory_space<vmem>>, vector<1x128x128xbf16>
    %30 = vector.shape_cast %29 : vector<1x128x128xbf16> to vector<128x128xbf16>
    %cst_23 = arith.constant dense<0.000000e+00> : vector<16x128xf32>
    %31 = tpu.matmul %28, %30, %cst_23 {dimension_numbers = #tpu.dot_dimension_numbers<[1], [0], [0], [1], [0, 0, 1, 1], [], []>} : vector<16x128xbf16>, vector<128x128xbf16>, vector<16x128xf32> -> vector<16x128xf32>
    %c0_24 = arith.constant 0 : index
    %c0_25 = arith.constant 0 : index
    %c0_26 = arith.constant 0 : index
    %32 = vector.load %arg10[%c0_24, %c0_25, %c0_26] : memref<2x1x128xf32, #tpu.memory_space<vmem>>, vector<1x1x128xf32>
    %33 = vector.shape_cast %32 : vector<1x1x128xf32> to vector<1x128xf32>
    %34 = vector.broadcast %33 : vector<1x128xf32> to vector<16x128xf32>
    %35 = arith.addf %31, %34 : vector<16x128xf32>
    %36 = vector.extract_strided_slice %16 {offsets = [0, 128], sizes = [16, 128], strides = [1, 1]} : vector<16x256xf32> to vector<16x128xf32>
    %37 = arith.truncf %36 : vector<16x128xf32> to vector<16x128xbf16>
    %c1 = arith.constant 1 : index
    %c0_27 = arith.constant 0 : index
    %c0_28 = arith.constant 0 : index
    %38 = vector.load %arg7[%c1, %c0_27, %c0_28] : memref<2x128x128xbf16, #tpu.memory_space<vmem>>, vector<1x128x128xbf16>
    %39 = vector.shape_cast %38 : vector<1x128x128xbf16> to vector<128x128xbf16>
    %cst_29 = arith.constant dense<0.000000e+00> : vector<16x128xf32>
    %40 = tpu.matmul %37, %39, %cst_29 {dimension_numbers = #tpu.dot_dimension_numbers<[1], [0], [0], [1], [0, 0, 1, 1], [], []>} : vector<16x128xbf16>, vector<128x128xbf16>, vector<16x128xf32> -> vector<16x128xf32>
    %c1_30 = arith.constant 1 : index
    %c0_31 = arith.constant 0 : index
    %c0_32 = arith.constant 0 : index
    %41 = vector.load %arg8[%c1_30, %c0_31, %c0_32] : memref<2x1x128xf32, #tpu.memory_space<vmem>>, vector<1x1x128xf32>
    %42 = vector.shape_cast %41 : vector<1x1x128xf32> to vector<1x128xf32>
    %43 = vector.broadcast %42 : vector<1x128xf32> to vector<16x128xf32>
    %44 = arith.addf %40, %43 : vector<16x128xf32>
    %cst_33 = arith.constant 0.000000e+00 : f32
    %45 = vector.broadcast %cst_33 : f32 to vector<16x128xf32>
    %46 = arith.maximumf %44, %45 : vector<16x128xf32>
    %47 = arith.truncf %46 : vector<16x128xf32> to vector<16x128xbf16>
    %c1_34 = arith.constant 1 : index
    %c0_35 = arith.constant 0 : index
    %c0_36 = arith.constant 0 : index
    %48 = vector.load %arg9[%c1_34, %c0_35, %c0_36] : memref<2x128x128xbf16, #tpu.memory_space<vmem>>, vector<1x128x128xbf16>
    %49 = vector.shape_cast %48 : vector<1x128x128xbf16> to vector<128x128xbf16>
    %cst_37 = arith.constant dense<0.000000e+00> : vector<16x128xf32>
    %50 = tpu.matmul %47, %49, %cst_37 {dimension_numbers = #tpu.dot_dimension_numbers<[1], [0], [0], [1], [0, 0, 1, 1], [], []>} : vector<16x128xbf16>, vector<128x128xbf16>, vector<16x128xf32> -> vector<16x128xf32>
    %c1_38 = arith.constant 1 : index
    %c0_39 = arith.constant 0 : index
    %c0_40 = arith.constant 0 : index
    %51 = vector.load %arg10[%c1_38, %c0_39, %c0_40] : memref<2x1x128xf32, #tpu.memory_space<vmem>>, vector<1x1x128xf32>
    %52 = vector.shape_cast %51 : vector<1x1x128xf32> to vector<1x128xf32>
    %53 = vector.broadcast %52 : vector<1x128xf32> to vector<16x128xf32>
    %54 = arith.addf %50, %53 : vector<16x128xf32>
    %55 = tpu.concatenate %35, %54 in 1 : vector<16x128xf32>, vector<16x128xf32> -> vector<16x256xf32>
    %56 = arith.truncf %55 : vector<16x256xf32> to vector<16x256xbf16>
    %c0_41 = arith.constant 0 : index
    %c0_42 = arith.constant 0 : index
    %57 = vector.load %arg4[%c0_41, %c0_42] : memref<16x16xbf16, #tpu.memory_space<vmem>>, vector<16x16xbf16>
    %cst_43 = arith.constant dense<0.000000e+00> : vector<16x256xf32>
    %58 = tpu.matmul %57, %56, %cst_43 {dimension_numbers = #tpu.dot_dimension_numbers<[1], [0], [0], [1], [0, 0, 1, 1], [], []>} : vector<16x16xbf16>, vector<16x256xbf16>, vector<16x256xf32> -> vector<16x256xf32>
    %c0_44 = arith.constant 0 : index
    %c0_45 = arith.constant 0 : index
    %59 = vector.load %arg13[%c0_44, %c0_45] : memref<128x768xbf16, #tpu.memory_space<vmem>>, vector<128x768xbf16>
    %cst_46 = arith.constant dense<0.000000e+00> : vector<16x768xf32>
    %60 = tpu.matmul %7, %59, %cst_46 {dimension_numbers = #tpu.dot_dimension_numbers<[1], [0], [0], [1], [0, 0, 1, 1], [], []>} : vector<16x128xbf16>, vector<128x768xbf16>, vector<16x768xf32> -> vector<16x768xf32>
    %c0_47 = arith.constant 0 : index
    %c0_48 = arith.constant 0 : index
    %61 = vector.load %arg14[%c0_47, %c0_48] : memref<1x768xf32, #tpu.memory_space<vmem>>, vector<1x768xf32>
    %62 = vector.broadcast %61 : vector<1x768xf32> to vector<16x768xf32>
    %63 = arith.addf %60, %62 : vector<16x768xf32>
    %64 = vector.extract_strided_slice %58 {offsets = [0, 0], sizes = [16, 128], strides = [1, 1]} : vector<16x256xf32> to vector<16x128xf32>
    %65 = vector.extract_strided_slice %63 {offsets = [0, 0], sizes = [16, 384], strides = [1, 1]} : vector<16x768xf32> to vector<16x384xf32>
    %66 = arith.truncf %64 : vector<16x128xf32> to vector<16x128xbf16>
    %c0_49 = arith.constant 0 : index
    %c0_50 = arith.constant 0 : index
    %c0_51 = arith.constant 0 : index
    %67 = vector.load %arg11[%c0_49, %c0_50, %c0_51] : memref<2x128x384xbf16, #tpu.memory_space<vmem>>, vector<1x128x384xbf16>
    %68 = vector.shape_cast %67 : vector<1x128x384xbf16> to vector<128x384xbf16>
    %cst_52 = arith.constant dense<0.000000e+00> : vector<16x384xf32>
    %69 = tpu.matmul %66, %68, %cst_52 {dimension_numbers = #tpu.dot_dimension_numbers<[1], [0], [0], [1], [0, 0, 1, 1], [], []>} : vector<16x128xbf16>, vector<128x384xbf16>, vector<16x384xf32> -> vector<16x384xf32>
    %c0_53 = arith.constant 0 : index
    %c0_54 = arith.constant 0 : index
    %c0_55 = arith.constant 0 : index
    %70 = vector.load %arg12[%c0_53, %c0_54, %c0_55] : memref<2x1x384xf32, #tpu.memory_space<vmem>>, vector<1x1x384xf32>
    %71 = vector.shape_cast %70 : vector<1x1x384xf32> to vector<1x384xf32>
    %72 = vector.broadcast %71 : vector<1x384xf32> to vector<16x384xf32>
    %73 = arith.addf %69, %72 : vector<16x384xf32>
    %74 = vector.extract_strided_slice %73 {offsets = [0, 0], sizes = [16, 256], strides = [1, 1]} : vector<16x384xf32> to vector<16x256xf32>
    %75 = vector.extract_strided_slice %65 {offsets = [0, 0], sizes = [16, 256], strides = [1, 1]} : vector<16x384xf32> to vector<16x256xf32>
    %76 = arith.addf %74, %75 : vector<16x256xf32>
    %77 = arith.negf %76 : vector<16x256xf32>
    %78 = math.exp %77 : vector<16x256xf32>
    %cst_56 = arith.constant 1.000000e+00 : f32
    %79 = vector.broadcast %cst_56 : f32 to vector<16x256xf32>
    %80 = arith.addf %79, %78 : vector<16x256xf32>
    %81 = arith.divf %79, %80 : vector<16x256xf32>
    %82 = vector.extract_strided_slice %81 {offsets = [0, 0], sizes = [16, 128], strides = [1, 1]} : vector<16x256xf32> to vector<16x128xf32>
    %83 = vector.extract_strided_slice %81 {offsets = [0, 128], sizes = [16, 128], strides = [1, 1]} : vector<16x256xf32> to vector<16x128xf32>
    %84 = vector.extract_strided_slice %73 {offsets = [0, 256], sizes = [16, 128], strides = [1, 1]} : vector<16x384xf32> to vector<16x128xf32>
    %85 = vector.extract_strided_slice %65 {offsets = [0, 256], sizes = [16, 128], strides = [1, 1]} : vector<16x384xf32> to vector<16x128xf32>
    %86 = arith.mulf %82, %85 : vector<16x128xf32>
    %87 = arith.addf %84, %86 : vector<16x128xf32>
    %88 = math.tanh %87 : vector<16x128xf32>
    %cst_57 = arith.constant 1.000000e+00 : f32
    %89 = vector.broadcast %cst_57 : f32 to vector<16x128xf32>
    %90 = arith.subf %89, %83 : vector<16x128xf32>
    %91 = arith.mulf %90, %88 : vector<16x128xf32>
    %92 = arith.mulf %83, %6 : vector<16x128xf32>
    %93 = arith.addf %91, %92 : vector<16x128xf32>
    %94 = vector.extract_strided_slice %58 {offsets = [0, 128], sizes = [16, 128], strides = [1, 1]} : vector<16x256xf32> to vector<16x128xf32>
    %95 = vector.extract_strided_slice %63 {offsets = [0, 384], sizes = [16, 384], strides = [1, 1]} : vector<16x768xf32> to vector<16x384xf32>
    %96 = arith.truncf %94 : vector<16x128xf32> to vector<16x128xbf16>
    %c1_58 = arith.constant 1 : index
    %c0_59 = arith.constant 0 : index
    %c0_60 = arith.constant 0 : index
    %97 = vector.load %arg11[%c1_58, %c0_59, %c0_60] : memref<2x128x384xbf16, #tpu.memory_space<vmem>>, vector<1x128x384xbf16>
    %98 = vector.shape_cast %97 : vector<1x128x384xbf16> to vector<128x384xbf16>
    %cst_61 = arith.constant dense<0.000000e+00> : vector<16x384xf32>
    %99 = tpu.matmul %96, %98, %cst_61 {dimension_numbers = #tpu.dot_dimension_numbers<[1], [0], [0], [1], [0, 0, 1, 1], [], []>} : vector<16x128xbf16>, vector<128x384xbf16>, vector<16x384xf32> -> vector<16x384xf32>
    %c1_62 = arith.constant 1 : index
    %c0_63 = arith.constant 0 : index
    %c0_64 = arith.constant 0 : index
    %100 = vector.load %arg12[%c1_62, %c0_63, %c0_64] : memref<2x1x384xf32, #tpu.memory_space<vmem>>, vector<1x1x384xf32>
    %101 = vector.shape_cast %100 : vector<1x1x384xf32> to vector<1x384xf32>
    %102 = vector.broadcast %101 : vector<1x384xf32> to vector<16x384xf32>
    %103 = arith.addf %99, %102 : vector<16x384xf32>
    %104 = vector.extract_strided_slice %103 {offsets = [0, 0], sizes = [16, 256], strides = [1, 1]} : vector<16x384xf32> to vector<16x256xf32>
    %105 = vector.extract_strided_slice %95 {offsets = [0, 0], sizes = [16, 256], strides = [1, 1]} : vector<16x384xf32> to vector<16x256xf32>
    %106 = arith.addf %104, %105 : vector<16x256xf32>
    %107 = arith.negf %106 : vector<16x256xf32>
    %108 = math.exp %107 : vector<16x256xf32>
    %cst_65 = arith.constant 1.000000e+00 : f32
    %109 = vector.broadcast %cst_65 : f32 to vector<16x256xf32>
    %110 = arith.addf %109, %108 : vector<16x256xf32>
    %111 = arith.divf %109, %110 : vector<16x256xf32>
    %112 = vector.extract_strided_slice %111 {offsets = [0, 0], sizes = [16, 128], strides = [1, 1]} : vector<16x256xf32> to vector<16x128xf32>
    %113 = vector.extract_strided_slice %111 {offsets = [0, 128], sizes = [16, 128], strides = [1, 1]} : vector<16x256xf32> to vector<16x128xf32>
    %114 = vector.extract_strided_slice %103 {offsets = [0, 256], sizes = [16, 128], strides = [1, 1]} : vector<16x384xf32> to vector<16x128xf32>
    %115 = vector.extract_strided_slice %95 {offsets = [0, 256], sizes = [16, 128], strides = [1, 1]} : vector<16x384xf32> to vector<16x128xf32>
    %116 = arith.mulf %112, %115 : vector<16x128xf32>
    %117 = arith.addf %114, %116 : vector<16x128xf32>
    %118 = math.tanh %117 : vector<16x128xf32>
    %cst_66 = arith.constant 1.000000e+00 : f32
    %119 = vector.broadcast %cst_66 : f32 to vector<16x128xf32>
    %120 = arith.subf %119, %113 : vector<16x128xf32>
    %121 = arith.mulf %120, %118 : vector<16x128xf32>
    %122 = arith.mulf %113, %6 : vector<16x128xf32>
    %123 = arith.addf %121, %122 : vector<16x128xf32>
    %124 = vector.broadcast %5 : i32 to vector<16x1xi32>
    %125 = arith.cmpi eq, %8, %124 : vector<16x1xi32>
    %c1_i32_67 = arith.constant 1 : i32
    %126 = vector.broadcast %c1_i32_67 : i32 to vector<16x1xi32>
    %127 = arith.cmpi eq, %9, %126 : vector<16x1xi32>
    %128 = arith.andi %125, %127 : vector<16x1xi1>
    %c2_i32 = arith.constant 2 : i32
    %129 = vector.broadcast %c2_i32 : i32 to vector<16x1xi32>
    %130 = arith.cmpi eq, %9, %129 : vector<16x1xi32>
    %131 = arith.andi %125, %130 : vector<16x1xi1>
    %132 = vector.shape_cast %131 : vector<16x1xi1> to vector<16x1xi1>
    %133 = vector.broadcast %132 : vector<16x1xi1> to vector<16x128xi1>
    %134 = arith.select %133, %123, %6 : vector<16x128xi1>, vector<16x128xf32>
    %135 = vector.shape_cast %128 : vector<16x1xi1> to vector<16x1xi1>
    %136 = vector.broadcast %135 : vector<16x1xi1> to vector<16x128xi1>
    %137 = arith.select %136, %93, %134 : vector<16x128xi1>, vector<16x128xf32>
    %c0_68 = arith.constant 0 : index
    %c0_69 = arith.constant 0 : index
    %138 = vector.load %arg15[%c0_68, %c0_69] : memref<16x128xf32, #tpu.memory_space<vmem>>, vector<16x128xf32>
    tpu.vector_store %arg15[%c0_68, %c0_69], %137 {strides = array<i32>} : memref<16x128xf32, #tpu.memory_space<vmem>>, vector<16x128xf32>,
    return
  }
  func.func @transform_0(%arg0: i32, %arg1: i32) -> (i32, i32) {
    %c0_i32 = arith.constant 0 : i32
    %c0_i32_0 = arith.constant 0 : i32
    %c0_i32_1 = arith.constant 0 : i32
    return %c0_i32, %c0_i32_0 : i32, i32
  }
  func.func @transform_1(%arg0: i32, %arg1: i32) -> (i32, i32) {
    %c0_i32 = arith.constant 0 : i32
    %c0_i32_0 = arith.constant 0 : i32
    %c0_i32_1 = arith.constant 0 : i32
    return %c0_i32, %c0_i32_0 : i32, i32
  }
  func.func @transform_2(%arg0: i32, %arg1: i32) -> (i32, i32) {
    %c0_i32 = arith.constant 0 : i32
    %c0_i32_0 = arith.constant 0 : i32
    %c0_i32_1 = arith.constant 0 : i32
    return %c0_i32, %c0_i32_0 : i32, i32
  }
  func.func @transform_3(%arg0: i32, %arg1: i32) -> (i32, i32) {
    %c0_i32 = arith.constant 0 : i32
    %c0_i32_0 = arith.constant 0 : i32
    %c0_i32_1 = arith.constant 0 : i32
    return %c0_i32, %c0_i32_0 : i32, i32
  }
  func.func @transform_4(%arg0: i32, %arg1: i32) -> (i32, i32) {
    %c0_i32 = arith.constant 0 : i32
    %c0_i32_0 = arith.constant 0 : i32
    %c0_i32_1 = arith.constant 0 : i32
    return %c0_i32, %c0_i32_0 : i32, i32
  }
  func.func @transform_5(%arg0: i32, %arg1: i32) -> (i32, i32, i32) {
    %c0_i32 = arith.constant 0 : i32
    %c0_i32_0 = arith.constant 0 : i32
    %c0_i32_1 = arith.constant 0 : i32
    %c0_i32_2 = arith.constant 0 : i32
    return %c0_i32, %c0_i32_0, %c0_i32_1 : i32, i32, i32
  }
  func.func @transform_6(%arg0: i32, %arg1: i32) -> (i32, i32, i32) {
    %c0_i32 = arith.constant 0 : i32
    %c0_i32_0 = arith.constant 0 : i32
    %c0_i32_1 = arith.constant 0 : i32
    %c0_i32_2 = arith.constant 0 : i32
    return %c0_i32, %c0_i32_0, %c0_i32_1 : i32, i32, i32
  }
  func.func @transform_7(%arg0: i32, %arg1: i32) -> (i32, i32, i32) {
    %c0_i32 = arith.constant 0 : i32
    %c0_i32_0 = arith.constant 0 : i32
    %c0_i32_1 = arith.constant 0 : i32
    %c0_i32_2 = arith.constant 0 : i32
    return %c0_i32, %c0_i32_0, %c0_i32_1 : i32, i32, i32
  }
  func.func @transform_8(%arg0: i32, %arg1: i32) -> (i32, i32, i32) {
    %c0_i32 = arith.constant 0 : i32
    %c0_i32_0 = arith.constant 0 : i32
    %c0_i32_1 = arith.constant 0 : i32
    %c0_i32_2 = arith.constant 0 : i32
    return %c0_i32, %c0_i32_0, %c0_i32_1 : i32, i32, i32
  }
  func.func @transform_9(%arg0: i32, %arg1: i32) -> (i32, i32, i32) {
    %c0_i32 = arith.constant 0 : i32
    %c0_i32_0 = arith.constant 0 : i32
    %c0_i32_1 = arith.constant 0 : i32
    %c0_i32_2 = arith.constant 0 : i32
    return %c0_i32, %c0_i32_0, %c0_i32_1 : i32, i32, i32
  }
  func.func @transform_10(%arg0: i32, %arg1: i32) -> (i32, i32, i32) {
    %c0_i32 = arith.constant 0 : i32
    %c0_i32_0 = arith.constant 0 : i32
    %c0_i32_1 = arith.constant 0 : i32
    %c0_i32_2 = arith.constant 0 : i32
    return %c0_i32, %c0_i32_0, %c0_i32_1 : i32, i32, i32
  }
  func.func @transform_11(%arg0: i32, %arg1: i32) -> (i32, i32) {
    %c0_i32 = arith.constant 0 : i32
    %c0_i32_0 = arith.constant 0 : i32
    %c0_i32_1 = arith.constant 0 : i32
    return %c0_i32, %c0_i32_0 : i32, i32
  }
  func.func @transform_12(%arg0: i32, %arg1: i32) -> (i32, i32) {
    %c0_i32 = arith.constant 0 : i32
    %c0_i32_0 = arith.constant 0 : i32
    %c0_i32_1 = arith.constant 0 : i32
    return %c0_i32, %c0_i32_0 : i32, i32
  }
  func.func @transform_13(%arg0: i32, %arg1: i32) -> (i32, i32) {
    %c0_i32 = arith.constant 0 : i32
    %c0_i32_0 = arith.constant 0 : i32
    %c0_i32_1 = arith.constant 0 : i32
    return %c0_i32, %c0_i32_0 : i32, i32
  }
}

module attributes {stable_mosaic.version = 11 : i64} {
  func.func @_encoder_kernel(%arg0: i32, %arg1: memref<16x6xf32, #tpu.memory_space<vmem>>, %arg2: memref<6x256xf32, #tpu.memory_space<vmem>>, %arg3: memref<1x256xf32, #tpu.memory_space<vmem>>, %arg4: memref<256x128xf32, #tpu.memory_space<vmem>>, %arg5: memref<1x128xf32, #tpu.memory_space<vmem>>, %arg6: memref<128x256xf32, #tpu.memory_space<vmem>>, %arg7: memref<1x256xf32, #tpu.memory_space<vmem>>, %arg8: memref<16x128xf32, #tpu.memory_space<vmem>>, %arg9: memref<16x256xbf16, #tpu.memory_space<vmem>>) attributes {dimension_semantics = [#tpu.dimension_semantics<arbitrary>], iteration_bounds = array<i64: 1>, scalar_prefetch = 0 : i64, scratch_operands = 0 : i64, tpu.core_type = #tpu.core_type<tc>, window_params = [{pipeline_mode = #tpu.pipeline_mode<synchronous>, transform_indices = @transform_0, window_bounds = array<i64: 16, 6>}, {pipeline_mode = #tpu.pipeline_mode<synchronous>, transform_indices = @transform_1, window_bounds = array<i64: 6, 256>}, {pipeline_mode = #tpu.pipeline_mode<synchronous>, transform_indices = @transform_2, window_bounds = array<i64: 1, 256>}, {pipeline_mode = #tpu.pipeline_mode<synchronous>, transform_indices = @transform_3, window_bounds = array<i64: 256, 128>}, {pipeline_mode = #tpu.pipeline_mode<synchronous>, transform_indices = @transform_4, window_bounds = array<i64: 1, 128>}, {pipeline_mode = #tpu.pipeline_mode<synchronous>, transform_indices = @transform_5, window_bounds = array<i64: 128, 256>}, {pipeline_mode = #tpu.pipeline_mode<synchronous>, transform_indices = @transform_6, window_bounds = array<i64: 1, 256>}, {pipeline_mode = #tpu.pipeline_mode<synchronous>, transform_indices = @transform_7, window_bounds = array<i64: 16, 128>}, {pipeline_mode = #tpu.pipeline_mode<synchronous>, transform_indices = @transform_8, window_bounds = array<i64: 16, 256>}]} {
    %c0 = arith.constant 0 : index
    %c0_0 = arith.constant 0 : index
    %0 = vector.load %arg1[%c0, %c0_0] : memref<16x6xf32, #tpu.memory_space<vmem>>, vector<16x6xf32>
    %c0_1 = arith.constant 0 : index
    %c0_2 = arith.constant 0 : index
    %1 = vector.load %arg2[%c0_1, %c0_2] : memref<6x256xf32, #tpu.memory_space<vmem>>, vector<6x256xf32>
    %cst = arith.constant dense<0.000000e+00> : vector<16x256xf32>
    %2 = tpu.matmul %0, %1, %cst {dimension_numbers = #tpu.dot_dimension_numbers<[1], [0], [0], [1], [0, 0, 1, 1], [], []>} : vector<16x6xf32>, vector<6x256xf32>, vector<16x256xf32> -> vector<16x256xf32>
    %c0_3 = arith.constant 0 : index
    %c0_4 = arith.constant 0 : index
    %3 = vector.load %arg3[%c0_3, %c0_4] : memref<1x256xf32, #tpu.memory_space<vmem>>, vector<1x256xf32>
    %4 = vector.broadcast %3 : vector<1x256xf32> to vector<16x256xf32>
    %5 = arith.addf %2, %4 : vector<16x256xf32>
    %c0_5 = arith.constant 0 : index
    %c0_6 = arith.constant 0 : index
    %6 = vector.load %arg4[%c0_5, %c0_6] : memref<256x128xf32, #tpu.memory_space<vmem>>, vector<256x128xf32>
    %cst_7 = arith.constant dense<0.000000e+00> : vector<16x128xf32>
    %7 = tpu.matmul %5, %6, %cst_7 {dimension_numbers = #tpu.dot_dimension_numbers<[1], [0], [0], [1], [0, 0, 1, 1], [], []>} : vector<16x256xf32>, vector<256x128xf32>, vector<16x128xf32> -> vector<16x128xf32>
    %c0_8 = arith.constant 0 : index
    %c0_9 = arith.constant 0 : index
    %8 = vector.load %arg5[%c0_8, %c0_9] : memref<1x128xf32, #tpu.memory_space<vmem>>, vector<1x128xf32>
    %9 = vector.broadcast %8 : vector<1x128xf32> to vector<16x128xf32>
    %10 = arith.addf %7, %9 : vector<16x128xf32>
    %c0_10 = arith.constant 0 : index
    %c0_11 = arith.constant 0 : index
    %11 = vector.load %arg8[%c0_10, %c0_11] : memref<16x128xf32, #tpu.memory_space<vmem>>, vector<16x128xf32>
    tpu.vector_store %arg8[%c0_10, %c0_11], %10 {strides = array<i32>} : memref<16x128xf32, #tpu.memory_space<vmem>>, vector<16x128xf32>,
    %c0_12 = arith.constant 0 : index
    %c0_13 = arith.constant 0 : index
    %12 = vector.load %arg6[%c0_12, %c0_13] : memref<128x256xf32, #tpu.memory_space<vmem>>, vector<128x256xf32>
    %cst_14 = arith.constant dense<0.000000e+00> : vector<16x256xf32>
    %13 = tpu.matmul %10, %12, %cst_14 {dimension_numbers = #tpu.dot_dimension_numbers<[1], [0], [0], [1], [0, 0, 1, 1], [], []>} : vector<16x128xf32>, vector<128x256xf32>, vector<16x256xf32> -> vector<16x256xf32>
    %c0_15 = arith.constant 0 : index
    %c0_16 = arith.constant 0 : index
    %14 = vector.load %arg7[%c0_15, %c0_16] : memref<1x256xf32, #tpu.memory_space<vmem>>, vector<1x256xf32>
    %15 = vector.broadcast %14 : vector<1x256xf32> to vector<16x256xf32>
    %16 = arith.addf %13, %15 : vector<16x256xf32>
    %17 = arith.truncf %16 : vector<16x256xf32> to vector<16x256xbf16>
    %c0_17 = arith.constant 0 : index
    %c0_18 = arith.constant 0 : index
    %18 = vector.load %arg9[%c0_17, %c0_18] : memref<16x256xbf16, #tpu.memory_space<vmem>>, vector<16x256xbf16>
    tpu.vector_store %arg9[%c0_17, %c0_18], %17 {strides = array<i32>} : memref<16x256xbf16, #tpu.memory_space<vmem>>, vector<16x256xbf16>,
    return
  }
  func.func @transform_0(%arg0: i32) -> (i32, i32) {
    %c0_i32 = arith.constant 0 : i32
    %c0_i32_0 = arith.constant 0 : i32
    %c0_i32_1 = arith.constant 0 : i32
    return %c0_i32, %c0_i32_0 : i32, i32
  }
  func.func @transform_1(%arg0: i32) -> (i32, i32) {
    %c0_i32 = arith.constant 0 : i32
    %c0_i32_0 = arith.constant 0 : i32
    %c0_i32_1 = arith.constant 0 : i32
    return %c0_i32, %c0_i32_0 : i32, i32
  }
  func.func @transform_2(%arg0: i32) -> (i32, i32) {
    %c0_i32 = arith.constant 0 : i32
    %c0_i32_0 = arith.constant 0 : i32
    %c0_i32_1 = arith.constant 0 : i32
    return %c0_i32, %c0_i32_0 : i32, i32
  }
  func.func @transform_3(%arg0: i32) -> (i32, i32) {
    %c0_i32 = arith.constant 0 : i32
    %c0_i32_0 = arith.constant 0 : i32
    %c0_i32_1 = arith.constant 0 : i32
    return %c0_i32, %c0_i32_0 : i32, i32
  }
  func.func @transform_4(%arg0: i32) -> (i32, i32) {
    %c0_i32 = arith.constant 0 : i32
    %c0_i32_0 = arith.constant 0 : i32
    %c0_i32_1 = arith.constant 0 : i32
    return %c0_i32, %c0_i32_0 : i32, i32
  }
  func.func @transform_5(%arg0: i32) -> (i32, i32) {
    %c0_i32 = arith.constant 0 : i32
    %c0_i32_0 = arith.constant 0 : i32
    %c0_i32_1 = arith.constant 0 : i32
    return %c0_i32, %c0_i32_0 : i32, i32
  }
  func.func @transform_6(%arg0: i32) -> (i32, i32) {
    %c0_i32 = arith.constant 0 : i32
    %c0_i32_0 = arith.constant 0 : i32
    %c0_i32_1 = arith.constant 0 : i32
    return %c0_i32, %c0_i32_0 : i32, i32
  }
  func.func @transform_7(%arg0: i32) -> (i32, i32) {
    %c0_i32 = arith.constant 0 : i32
    %c0_i32_0 = arith.constant 0 : i32
    %c0_i32_1 = arith.constant 0 : i32
    return %c0_i32, %c0_i32_0 : i32, i32
  }
  func.func @transform_8(%arg0: i32) -> (i32, i32) {
    %c0_i32 = arith.constant 0 : i32
    %c0_i32_0 = arith.constant 0 : i32
    %c0_i32_1 = arith.constant 0 : i32
    return %c0_i32, %c0_i32_0 : i32, i32
  }
}

</mosaic_0001>

<llo_original>
// kernel: model_forward.2
$region0: #{model_forward.2}
  #allocation0 [shape = 'u32[]', space=smem, size = 0x4, offset = 0x4, fixed_abs, tag = 'smem constant byte address 0x4 - core index']
  #allocation1 [shape = 'u32[144,128]{1,0:T(1,128)}', space=vmem, size = 0x12000, scoped, tag = 'internal scratch']
  %s0 = inlined_call_operand.vmem [shape: f32[16,6], index: 0, kind: input, shape index: {}]
  %s1 = inlined_call_operand.vmem [shape: f32[6,256], index: 1, kind: input, shape index: {}]
  %s2 = inlined_call_operand.vmem [shape: f32[1,256], index: 2, kind: input, shape index: {}]
  %s3 = inlined_call_operand.vmem [shape: f32[256,128], index: 3, kind: input, shape index: {}]
  %s4 = inlined_call_operand.vmem [shape: f32[1,128], index: 4, kind: input, shape index: {}]
  %s5 = inlined_call_operand.vmem [shape: f32[128,256], index: 5, kind: input, shape index: {}]
  %s6 = inlined_call_operand.vmem [shape: f32[1,256], index: 6, kind: input, shape index: {}]
  %s7 = inlined_call_operand.hbm [shape: f32[16,128], index: 7, kind: output, shape index: {0}]
  %s8 = inlined_call_operand.vmem [shape: bf16[16,256], index: 8, kind: output, shape index: {1}]
  %9 = xla_tuple %s7, %s8
  %s10 = sld [smem:[#allocation0]]
  $region46: #{model_forward.2} parent=0
    _
  %s12 = ssub.s32 1, %s10
  %s13 = scalar_select 0, %s12, %s10
  $region1: #{model_forward.2} parent=0
    #allocation2 [shape = 'u8[8192]{0}', space=vmem, size = 0x2000, scoped, tag = 'output window, operand 0, single buffered']
    #allocation3 [shape = 's32[1]{0}', space=sflag, size = 0x4, scoped, tag = 'scoped memory for model_forward.2']
    %14 = vsyncpa [#allocation3], 0
    // Predicated region
    $region2: #{model_forward.2} parent=1 // pred_check
      _
    $region3: #{model_forward.2} parent=1 // pred_check_branch
      %16 = sbr.rel (0) target = $region5
    $region4: #{model_forward.2} parent=1 // pred_region
      _
    $region5: #{model_forward.2} parent=1 // pred_fallthru
      _
    // Predicated region
    $region6: #{model_forward.2} parent=1 // pred_check
      _
    $region7: #{model_forward.2} parent=1 // pred_check_branch
      %18 = sbr.rel (0) target = $region9
    $region8: #{model_forward.2} parent=1 // pred_region
      _
    $region9: #{model_forward.2} parent=1 // pred_fallthru
      _
    // Predicated region
    $region10: #{model_forward.2} parent=1 // pred_check
      _
    $region11: #{model_forward.2} parent=1 // pred_check_branch
      %20 = sbr.rel (0) target = $region13
    $region12: #{model_forward.2} parent=1 // pred_region
      _
    $region13: #{model_forward.2} parent=1 // pred_fallthru
      _
    // Predicated region
    $region14: #{model_forward.2} parent=1 // pred_check
      _
    $region15: #{model_forward.2} parent=1 // pred_check_branch
      %22 = sbr.rel (0) target = $region17
    $region16: #{model_forward.2} parent=1 // pred_region
      _
    $region17: #{model_forward.2} parent=1 // pred_fallthru
      _
    // Predicated region
    $region18: #{model_forward.2} parent=1 // pred_check
      _
    $region19: #{model_forward.2} parent=1 // pred_check_branch
      %24 = sbr.rel (0) target = $region21
    $region20: #{model_forward.2} parent=1 // pred_region
      _
    $region21: #{model_forward.2} parent=1 // pred_fallthru
      _
    // Predicated region
    $region22: #{model_forward.2} parent=1 // pred_check
      _
    $region23: #{model_forward.2} parent=1 // pred_check_branch
      %26 = sbr.rel (0) target = $region25
    $region24: #{model_forward.2} parent=1 // pred_region
      _
    $region25: #{model_forward.2} parent=1 // pred_fallthru
      _
    // Predicated region
    $region26: #{model_forward.2} parent=1 // pred_check
      _
    $region27: #{model_forward.2} parent=1 // pred_check_branch
      %28 = sbr.rel (0) target = $region29
    $region28: #{model_forward.2} parent=1 // pred_region
      _
    $region29: #{model_forward.2} parent=1 // pred_fallthru
      _
    %v29 = vld [vmem:[%s0] sm:$0xff]
    %v30 = vld [vmem:[%s0 + $0x8] sm:$0xff]
    %v31 = vld [vmem:[%s1] sm:$0x3f]
    %v32 = vld [vmem:[%s1 + $0x8] sm:$0x3f]
    %v33 = vld [vmem:[%s2] sm:$0x3]
    %v35 = vlaneseq
    %v36 = vshrl.u32 %v35, 7
    %v37 = vsub.s32 0, %v36
    %v38 = vrot.slane %v33, %v37
    %v39 = vlaneseq
    %v40 = vshrl.u32 %v39, 7
    %v41 = vsub.s32 1, %v40
    %v42 = vrot.slane %v33, %v41
    %vm45 = vcmask 48128
    %v47 = vsel %vm45, %v29, 0
    %v50 = vsel %vm45, %v30, 0
    %vm52 = vcmask 1045504
    %v54 = vsel %vm52, %v31, 0
    %v57 = vsel %vm52, %v32, 0
    %59 = vmatprep.subr.mxu0 0.0
    %60 = vmatpush1.msra.mxu0 0.0
    %61 = vmatprep.subr.mxu0 0.0
    %62 = vmatpush1.msra.mxu0 0.0
    %63 = vmatprep.subr.mxu0 0.0
    %64 = vmatpush1.msra.mxu0 0.0
    %65 = vmatprep.subr.mxu0 0.0
    %66 = vmatpush1.msra.mxu0 0.0
    %67 = vmatprep.subr.mxu0 0.0
    %68 = vmatpush1.msra.mxu0 0.0
    %69 = vmatprep.subr.mxu0 0.0
    %70 = vmatpush1.msra.mxu0 0.0
    %71 = vmatprep.subr.mxu0 0.0
    %72 = vmatpush1.msra.mxu0 0.0
    %73 = vmatprep.subr.mxu0 0.0
    %74 = vmatpush1.msra.mxu0 0.0
    %75 = vmatprep.subr.mxu0 0.0
    %76 = vmatpush1.msra.mxu0 0.0
    %77 = vmatprep.subr.mxu0 0.0
    %78 = vmatpush1.msra.mxu0 0.0
    %79 = vmatprep.subr.mxu0 0.0
    %80 = vmatpush1.msra.mxu0 0.0
    %81 = vmatprep.subr.mxu0 0.0
    %82 = vmatpush1.msra.mxu0 0.0
    %83 = vmatprep.subr.mxu0 0.0
    %84 = vmatpush1.msra.mxu0 0.0
    %85 = vmatprep.subr.mxu0 0.0
    %86 = vmatpush1.msra.mxu0 0.0
    %87 = vmatprep.subr.mxu0 0.0
    %88 = vmatpush1.msra.mxu0 0.0
    %89 = vmatprep.subr.mxu0 %v57
    %90 = vmatpush1.msra.mxu0 %v54
    %91 = vmatprep.subr.mxu0 0.0
    %92 = vmatpush2.msra.mxu0 0.0
    %93 = vmatprep.subr.mxu0 0.0
    %94 = vmatpush2.msra.mxu0 0.0
    %95 = vmatprep.subr.mxu0 0.0
    %96 = vmatpush2.msra.mxu0 0.0
    %97 = vmatprep.subr.mxu0 0.0
    %98 = vmatpush2.msra.mxu0 0.0
    %99 = vmatprep.subr.mxu0 0.0
    %100 = vmatpush2.msra.mxu0 0.0
    %101 = vmatprep.subr.mxu0 0.0
    %102 = vmatpush2.msra.mxu0 0.0
    %103 = vmatprep.subr.mxu0 0.0
    %104 = vmatpush2.msra.mxu0 0.0
    %105 = vmatprep.subr.mxu0 0.0
    %106 = vmatpush2.msra.mxu0 0.0
    %107 = vmatprep.subr.mxu0 0.0
    %108 = vmatpush2.msra.mxu0 0.0
    %109 = vmatprep.subr.mxu0 0.0
    %110 = vmatpush2.msra.mxu0 0.0
    %111 = vmatprep.subr.mxu0 0.0
    %112 = vmatpush2.msra.mxu0 0.0
    %113 = vmatprep.subr.mxu0 0.0
    %114 = vmatpush2.msra.mxu0 0.0
    %115 = vmatprep.subr.mxu0 0.0
    %116 = vmatpush2.msra.mxu0 0.0
    %117 = vmatprep.subr.mxu0 0.0
    %118 = vmatpush2.msra.mxu0 0.0
    %119 = vmatprep.subr.mxu0 0.0
    %120 = vmatpush2.msra.mxu0 0.0
    %121 = vmatprep.subr.mxu0 0.0
    %122 = vmatpush2.msra.mxu0 0.0
    %123 = vmatprep.mubr.f32.mxu0 0.0
    %124 = vmatmul.mubr.f32.gmra.mxu0 %v47
    %v125 = vpop.f32.mrf.mxu0
    %v126 = vadd.f32 %v38, %v125
    %v127 = vpop.f32.mrf.mxu0
    %v128 = vadd.f32 %v42, %v127
    %129 = vmatprep.mubr.f32.mxu0 0.0
    %130 = vmatmul.mubr.f32.gmra.mxu0 %v50
    %v131 = vpop.f32.mrf.mxu0
    %v132 = vadd.f32 %v38, %v131
    %v133 = vpop.f32.mrf.mxu0
    %v134 = vadd.f32 %v42, %v133
    %135 = vdwg.mxu0
    %v136 = vld [vmem:[%s3] sm:$0xff]
    %v137 = vld [vmem:[%s3 + $0x8] sm:$0xff]
    %v138 = vld [vmem:[%s3 + $0x10] sm:$0xff]
    %v139 = vld [vmem:[%s3 + $0x18] sm:$0xff]
    %v140 = vld [vmem:[%s3 + $0x20] sm:$0xff]
    %v141 = vld [vmem:[%s3 + $0x28] sm:$0xff]
    %v142 = vld [vmem:[%s3 + $0x30] sm:$0xff]
    %v143 = vld [vmem:[%s3 + $0x38] sm:$0xff]
    %v144 = vld [vmem:[%s3 + $0x40] sm:$0xff]
    %v145 = vld [vmem:[%s3 + $0x48] sm:$0xff]
    %v146 = vld [vmem:[%s3 + $0x50] sm:$0xff]
    %v147 = vld [vmem:[%s3 + $0x58] sm:$0xff]
    %v148 = vld [vmem:[%s3 + $0x60] sm:$0xff]
    %v149 = vld [vmem:[%s3 + $0x68] sm:$0xff]
    %v150 = vld [vmem:[%s3 + $0x70] sm:$0xff]
    %v151 = vld [vmem:[%s3 + $0x78] sm:$0xff]
    %v152 = vld [vmem:[%s3 + $0x80] sm:$0xff]
    %v153 = vld [vmem:[%s3 + $0x88] sm:$0xff]
    %v154 = vld [vmem:[%s3 + $0x90] sm:$0xff]
    %v155 = vld [vmem:[%s3 + $0x98] sm:$0xff]
    %v156 = vld [vmem:[%s3 + $0xa0] sm:$0xff]
    %v157 = vld [vmem:[%s3 + $0xa8] sm:$0xff]
    %v158 = vld [vmem:[%s3 + $0xb0] sm:$0xff]
    %v159 = vld [vmem:[%s3 + $0xb8] sm:$0xff]
    %v160 = vld [vmem:[%s3 + $0xc0] sm:$0xff]
    %v161 = vld [vmem:[%s3 + $0xc8] sm:$0xff]
    %v162 = vld [vmem:[%s3 + $0xd0] sm:$0xff]
    %v163 = vld [vmem:[%s3 + $0xd8] sm:$0xff]
    %v164 = vld [vmem:[%s3 + $0xe0] sm:$0xff]
    %v165 = vld [vmem:[%s3 + $0xe8] sm:$0xff]
    %v166 = vld [vmem:[%s3 + $0xf0] sm:$0xff]
    %v167 = vld [vmem:[%s3 + $0xf8] sm:$0xff]
    %v168 = vld [vmem:[%s4] sm:$0x1]
    %v170 = vlaneseq
    %v171 = vshrl.u32 %v170, 7
    %v172 = vsub.s32 0, %v171
    %v173 = vrot.slane %v168, %v172
    %175 = vmatprep.subr.mxu0 0.0
    %176 = vmatpush1.msra.mxu0 %v151
    %177 = vmatprep.subr.mxu0 0.0
    %178 = vmatpush1.msra.mxu0 %v150
    %179 = vmatprep.subr.mxu0 0.0
    %180 = vmatpush1.msra.mxu0 %v149
    %181 = vmatprep.subr.mxu0 0.0
    %182 = vmatpush1.msra.mxu0 %v148
    %183 = vmatprep.subr.mxu0 0.0
    %184 = vmatpush1.msra.mxu0 %v147
    %185 = vmatprep.subr.mxu0 0.0
    %186 = vmatpush1.msra.mxu0 %v146
    %187 = vmatprep.subr.mxu0 0.0
    %188 = vmatpush1.msra.mxu0 %v145
    %189 = vmatprep.subr.mxu0 0.0
    %190 = vmatpush1.msra.mxu0 %v144
    %191 = vmatprep.subr.mxu0 0.0
    %192 = vmatpush1.msra.mxu0 %v143
    %193 = vmatprep.subr.mxu0 0.0
    %194 = vmatpush1.msra.mxu0 %v142
    %195 = vmatprep.subr.mxu0 0.0
    %196 = vmatpush1.msra.mxu0 %v141
    %197 = vmatprep.subr.mxu0 0.0
    %198 = vmatpush1.msra.mxu0 %v140
    %199 = vmatprep.subr.mxu0 0.0
    %200 = vmatpush1.msra.mxu0 %v139
    %201 = vmatprep.subr.mxu0 0.0
    %202 = vmatpush1.msra.mxu0 %v138
    %203 = vmatprep.subr.mxu0 0.0
    %204 = vmatpush1.msra.mxu0 %v137
    %205 = vmatprep.subr.mxu0 0.0
    %206 = vmatpush1.msra.mxu0 %v136
    %207 = vmatprep.subr.mxu0 0.0
    %208 = vmatpush2.msra.mxu0 %v167
    %209 = vmatprep.subr.mxu0 0.0
    %210 = vmatpush2.msra.mxu0 %v166
    %211 = vmatprep.subr.mxu0 0.0
    %212 = vmatpush2.msra.mxu0 %v165
    %213 = vmatprep.subr.mxu0 0.0
    %214 = vmatpush2.msra.mxu0 %v164
    %215 = vmatprep.subr.mxu0 0.0
    %216 = vmatpush2.msra.mxu0 %v163
    %217 = vmatprep.subr.mxu0 0.0
    %218 = vmatpush2.msra.mxu0 %v162
    %219 = vmatprep.subr.mxu0 0.0
    %220 = vmatpush2.msra.mxu0 %v161
    %221 = vmatprep.subr.mxu0 0.0
    %222 = vmatpush2.msra.mxu0 %v160
    %223 = vmatprep.subr.mxu0 0.0
    %224 = vmatpush2.msra.mxu0 %v159
    %225 = vmatprep.subr.mxu0 0.0
    %226 = vmatpush2.msra.mxu0 %v158
    %227 = vmatprep.subr.mxu0 0.0
    %228 = vmatpush2.msra.mxu0 %v157
    %229 = vmatprep.subr.mxu0 0.0
    %230 = vmatpush2.msra.mxu0 %v156
    %231 = vmatprep.subr.mxu0 0.0
    %232 = vmatpush2.msra.mxu0 %v155
    %233 = vmatprep.subr.mxu0 0.0
    %234 = vmatpush2.msra.mxu0 %v154
    %235 = vmatprep.subr.mxu0 0.0
    %236 = vmatpush2.msra.mxu0 %v153
    %237 = vmatprep.subr.mxu0 0.0
    %238 = vmatpush2.msra.mxu0 %v152
    %239 = vmatprep.mubr.f32.mxu0 %v128
    %240 = vmatmul.mubr.f32.gmra.mxu0 %v126
    %v241 = vpop.f32.mrf.mxu0
    %v242 = vadd.f32 %v173, %v241
    %v243 = vpop.f32.mrf.mxu0
    %244 = vmatprep.mubr.f32.mxu0 %v134
    %245 = vmatmul.mubr.f32.gmra.mxu0 %v132
    %v246 = vpop.f32.mrf.mxu0
    %v247 = vadd.f32 %v173, %v246
    %v248 = vpop.f32.mrf.mxu0
    %249 = vdwg.mxu0
    %250 = vst [vmem:[#allocation2] sm:$0xff] %v242
    %251 = vst [vmem:[#allocation2 + $0x8] sm:$0xff] %v247
    %v252 = vld [vmem:[%s5] sm:$0xff]
    %v253 = vld [vmem:[%s5 + $0x8] sm:$0xff]
    %v254 = vld [vmem:[%s5 + $0x10] sm:$0xff]
    %v255 = vld [vmem:[%s5 + $0x18] sm:$0xff]
    %v256 = vld [vmem:[%s5 + $0x20] sm:$0xff]
    %v257 = vld [vmem:[%s5 + $0x28] sm:$0xff]
    %v258 = vld [vmem:[%s5 + $0x30] sm:$0xff]
    %v259 = vld [vmem:[%s5 + $0x38] sm:$0xff]
    %v260 = vld [vmem:[%s5 + $0x40] sm:$0xff]
    %v261 = vld [vmem:[%s5 + $0x48] sm:$0xff]
    %v262 = vld [vmem:[%s5 + $0x50] sm:$0xff]
    %v263 = vld [vmem:[%s5 + $0x58] sm:$0xff]
    %v264 = vld [vmem:[%s5 + $0x60] sm:$0xff]
    %v265 = vld [vmem:[%s5 + $0x68] sm:$0xff]
    %v266 = vld [vmem:[%s5 + $0x70] sm:$0xff]
    %v267 = vld [vmem:[%s5 + $0x78] sm:$0xff]
    %v268 = vld [vmem:[%s5 + $0x80] sm:$0xff]
    %v269 = vld [vmem:[%s5 + $0x88] sm:$0xff]
    %v270 = vld [vmem:[%s5 + $0x90] sm:$0xff]
    %v271 = vld [vmem:[%s5 + $0x98] sm:$0xff]
    %v272 = vld [vmem:[%s5 + $0xa0] sm:$0xff]
    %v273 = vld [vmem:[%s5 + $0xa8] sm:$0xff]
    %v274 = vld [vmem:[%s5 + $0xb0] sm:$0xff]
    %v275 = vld [vmem:[%s5 + $0xb8] sm:$0xff]
    %v276 = vld [vmem:[%s5 + $0xc0] sm:$0xff]
    %v277 = vld [vmem:[%s5 + $0xc8] sm:$0xff]
    %v278 = vld [vmem:[%s5 + $0xd0] sm:$0xff]
    %v279 = vld [vmem:[%s5 + $0xd8] sm:$0xff]
    %v280 = vld [vmem:[%s5 + $0xe0] sm:$0xff]
    %v281 = vld [vmem:[%s5 + $0xe8] sm:$0xff]
    %v282 = vld [vmem:[%s5 + $0xf0] sm:$0xff]
    %v283 = vld [vmem:[%s5 + $0xf8] sm:$0xff]
    %v284 = vld [vmem:[%s6] sm:$0x3]
    %v286 = vlaneseq
    %v287 = vshrl.u32 %v286, 7
    %v288 = vsub.s32 0, %v287
    %v289 = vrot.slane %v284, %v288
    %v290 = vlaneseq
    %v291 = vshrl.u32 %v290, 7
    %v292 = vsub.s32 1, %v291
    %v293 = vrot.slane %v284, %v292
    %296 = vmatprep.subr.mxu0 %v283
    %297 = vmatpush1.msra.mxu0 %v282
    %298 = vmatprep.subr.mxu0 %v281
    %299 = vmatpush1.msra.mxu0 %v280
    %300 = vmatprep.subr.mxu0 %v279
    %301 = vmatpush1.msra.mxu0 %v278
    %302 = vmatprep.subr.mxu0 %v277
    %303 = vmatpush1.msra.mxu0 %v276
    %304 = vmatprep.subr.mxu0 %v275
    %305 = vmatpush1.msra.mxu0 %v274
    %306 = vmatprep.subr.mxu0 %v273
    %307 = vmatpush1.msra.mxu0 %v272
    %308 = vmatprep.subr.mxu0 %v271
    %309 = vmatpush1.msra.mxu0 %v270
    %310 = vmatprep.subr.mxu0 %v269
    %311 = vmatpush1.msra.mxu0 %v268
    %312 = vmatprep.subr.mxu0 %v267
    %313 = vmatpush1.msra.mxu0 %v266
    %314 = vmatprep.subr.mxu0 %v265
    %315 = vmatpush1.msra.mxu0 %v264
    %316 = vmatprep.subr.mxu0 %v263
    %317 = vmatpush1.msra.mxu0 %v262
    %318 = vmatprep.subr.mxu0 %v261
    %319 = vmatpush1.msra.mxu0 %v260
    %320 = vmatprep.subr.mxu0 %v259
    %321 = vmatpush1.msra.mxu0 %v258
    %322 = vmatprep.subr.mxu0 %v257
    %323 = vmatpush1.msra.mxu0 %v256
    %324 = vmatprep.subr.mxu0 %v255
    %325 = vmatpush1.msra.mxu0 %v254
    %326 = vmatprep.subr.mxu0 %v253
    %327 = vmatpush1.msra.mxu0 %v252
    %328 = vmatprep.subr.mxu0 0.0
    %329 = vmatpush2.msra.mxu0 0.0
    %330 = vmatprep.subr.mxu0 0.0
    %331 = vmatpush2.msra.mxu0 0.0
    %332 = vmatprep.subr.mxu0 0.0
    %333 = vmatpush2.msra.mxu0 0.0
    %334 = vmatprep.subr.mxu0 0.0
    %335 = vmatpush2.msra.mxu0 0.0
    %336 = vmatprep.subr.mxu0 0.0
    %337 = vmatpush2.msra.mxu0 0.0
    %338 = vmatprep.subr.mxu0 0.0
    %339 = vmatpush2.msra.mxu0 0.0
    %340 = vmatprep.subr.mxu0 0.0
    %341 = vmatpush2.msra.mxu0 0.0
    %342 = vmatprep.subr.mxu0 0.0
    %343 = vmatpush2.msra.mxu0 0.0
    %344 = vmatprep.subr.mxu0 0.0
    %345 = vmatpush2.msra.mxu0 0.0
    %346 = vmatprep.subr.mxu0 0.0
    %347 = vmatpush2.msra.mxu0 0.0
    %348 = vmatprep.subr.mxu0 0.0
    %349 = vmatpush2.msra.mxu0 0.0
    %350 = vmatprep.subr.mxu0 0.0
    %351 = vmatpush2.msra.mxu0 0.0
    %352 = vmatprep.subr.mxu0 0.0
    %353 = vmatpush2.msra.mxu0 0.0
    %354 = vmatprep.subr.mxu0 0.0
    %355 = vmatpush2.msra.mxu0 0.0
    %356 = vmatprep.subr.mxu0 0.0
    %357 = vmatpush2.msra.mxu0 0.0
    %358 = vmatprep.subr.mxu0 0.0
    %359 = vmatpush2.msra.mxu0 0.0
    %360 = vmatprep.mubr.f32.mxu0 0.0
    %361 = vmatmul.mubr.f32.gmra.mxu0 %v242
    %v362 = vpop.f32.mrf.mxu0
    %v363 = vadd.f32 %v289, %v362
    %v364 = vpop.f32.mrf.mxu0
    %v365 = vadd.f32 %v293, %v364
    %366 = vmatprep.mubr.f32.mxu0 0.0
    %367 = vmatmul.mubr.f32.gmra.mxu0 %v247
    %v368 = vpop.f32.mrf.mxu0
    %v369 = vadd.f32 %v289, %v368
    %v370 = vpop.f32.mrf.mxu0
    %v371 = vadd.f32 %v293, %v370
    %372 = vdwg.mxu0
    %v373 = vpack.c.bf16 %v369, %v363
    %v374 = vpack.c.bf16 %v371, %v365
    %v377 = vunpack.c.l.b16 %v373
    %v378 = vunpack.c.l.b16 %v374
    %v379 = vunpack.c.h.b16 %v373
    %v380 = vunpack.c.h.b16 %v374
    %v381 = vpack.c.b16 %v378, %v377
    %v382 = vpack.c.b16 %v380, %v379
    %385 = vst [vmem:[%s8] sm:$0xff] %v381
    %386 = vst [vmem:[%s8 + $0x8] sm:$0xff] %v382
    // Predicated region
    $region30: #{model_forward.2} parent=1 // pred_check
      _
    $region31: #{model_forward.2} parent=1 // pred_check_branch
      %388 = sbr.rel (0) target = $region33
    $region32: #{model_forward.2} parent=1 // pred_region
      %s390 = ssub.s32 256, 256
      %391 = vsyncadd [#allocation3], %s390
      %s392 = sshll.u32 [#allocation2], 4
      %s393 = int_to_ptr.vmem [resolvable:$true] %s392
      %398 = dma.vmem_to_hbm [thread:$0]  %s393, 256, %s7, [#allocation3], 128, 128, 8
    $region33: #{model_forward.2} parent=1 // pred_fallthru
      _
    // Predicated region
    $region34: #{model_forward.2} parent=1 // pred_check
      _
    $region35: #{model_forward.2} parent=1 // pred_check_branch
      %400 = sbr.rel (0) target = $region37
    $region36: #{model_forward.2} parent=1 // pred_region
      _
    $region37: #{model_forward.2} parent=1 // pred_fallthru
      _
    // Predicated region
    $region38: #{model_forward.2} parent=1 // pred_check
      _
    $region39: #{model_forward.2} parent=1 // pred_check_branch
      %402 = sbr.rel (0) target = $region41
    $region40: #{model_forward.2} parent=1 // pred_region
      %403 = dma.done [#allocation3], 256
    $region41: #{model_forward.2} parent=1 // pred_fallthru
      _
    // Predicated region
    $region42: #{model_forward.2} parent=1 // pred_check
      _
    $region43: #{model_forward.2} parent=1 // pred_check_branch
      %405 = sbr.rel (0) target = $region45
    $region44: #{model_forward.2} parent=1 // pred_region
      _
    $region45: #{model_forward.2} parent=1 // pred_fallthru
      _
    %406 = vsyncpa [#allocation3], 1

// kernel: model_forward.3
$region0: #{model_forward.3}
  #allocation0 [shape = 'u32[]', space=smem, size = 0x4, offset = 0x4, fixed_abs, tag = 'smem constant byte address 0x4 - core index']
  #allocation1 [shape = 'u32[144,128]{1,0:T(1,128)}', space=vmem, size = 0x12000, scoped, tag = 'internal scratch']
  %s0 = inlined_call_operand.vmem [shape: s32[16,1], index: 0, kind: input, shape index: {}]
  %s1 = inlined_call_operand.vmem [shape: s32[16,1], index: 1, kind: input, shape index: {}]
  %s2 = inlined_call_operand.vmem [shape: bf16[16,16], index: 2, kind: input, shape index: {}]
  %s3 = inlined_call_operand.vmem [shape: bf16[16,256], index: 3, kind: input, shape index: {}]
  %s4 = inlined_call_operand.vmem [shape: bf16[128,256], index: 4, kind: input, shape index: {}]
  %s5 = inlined_call_operand.vmem [shape: bf16[2,128,128], index: 5, kind: input, shape index: {}]
  %s6 = inlined_call_operand.vmem [shape: f32[2,1,128], index: 6, kind: input, shape index: {}]
  %s7 = inlined_call_operand.vmem [shape: bf16[2,128,128], index: 7, kind: input, shape index: {}]
  %s8 = inlined_call_operand.vmem [shape: f32[2,1,128], index: 8, kind: input, shape index: {}]
  %s9 = inlined_call_operand.vmem [shape: bf16[2,128,384], index: 9, kind: input, shape index: {}]
  %s10 = inlined_call_operand.vmem [shape: f32[2,1,384], index: 10, kind: input, shape index: {}]
  %s11 = inlined_call_operand.vmem [shape: bf16[128,768], index: 11, kind: input, shape index: {}]
  %s12 = inlined_call_operand.vmem [shape: f32[1,768], index: 12, kind: input, shape index: {}]
  %s13 = inlined_call_operand.hbm [shape: f32[16,128], index: 13, kind: output, shape index: {}]
  %s14 = sld [smem:[#allocation0]]
  $region89: #{model_forward.3} parent=0
    _
  %s16 = ssub.s32 1, %s14
  %s17 = scalar_select 0, %s16, %s14
  $region1: #{model_forward.3} parent=0
    #allocation2 [shape = 'u8[8192]{0}', space=vmem, size = 0x2000, scoped, tag = 'output window, operand 0, single buffered']
    #allocation3 [shape = 's32[2]{0}', space=sflag, size = 0x8, scoped, tag = 'scoped memory for model_forward.3']
    %18 = vsyncpa [#allocation3], 0
    loop: start=0, step=1, limit=4
    $region2: #{model_forward.3} parent=1 // loop_pre_header
      _
    $region3: #{model_forward.3} parent=1 // loop_header
      %s20 = sphi 0, %s24
      %p21 = scmp.ge.s32.totalorder %s20, 4
      %s27 = sphi 0, %s39
      %s28 = sphi 0, %s35
      %s29 = sphi 0, %s27
      %s30 = sphi 0, %s28
      %s31 = sphi 0, %s29
      %s32 = sphi 0, %s30
      %s40 = sphi 0, %s40
      %s42 = sphi 0, %s40
      %s43 = sphi 0, %s42
      %s57 = sphi 0, %s43
      %s61 = sphi 0, %s61
      %s63 = sphi 0, %s61
      %s64 = sphi 0, %s63
      %s78 = sphi 0, %s64
      %s82 = sphi 0, %s82
      %s84 = sphi 0, %s82
      %s85 = sphi 0, %s84
      %s99 = sphi 0, %s85
      %s103 = sphi 0, %s103
      %s105 = sphi 0, %s103
      %s106 = sphi 0, %s105
      %s120 = sphi 0, %s106
      %s124 = sphi 0, %s124
      %s126 = sphi 0, %s124
      %s127 = sphi 0, %s126
      %s141 = sphi 0, %s127
      %s145 = sphi 0, %s145
      %s147 = sphi 0, %s145
      %s148 = sphi 0, %s147
      %s162 = sphi 0, %s148
      %s166 = sphi 0, %s166
      %s168 = sphi 0, %s166
      %s169 = sphi 0, %s168
      %s183 = sphi 0, %s169
      %s187 = sphi 0, %s187
      %s189 = sphi 0, %s187
      %s190 = sphi 0, %s189
      %s204 = sphi 0, %s190
      %s208 = sphi 0, %s208
      %s210 = sphi 0, %s208
      %s211 = sphi 0, %s210
      %s225 = sphi 0, %s211
      %s229 = sphi 0, %s229
      %s231 = sphi 0, %s229
      %s232 = sphi 0, %s231
      %s246 = sphi 0, %s232
      %s250 = sphi 0, %s250
      %s252 = sphi 0, %s250
      %s253 = sphi 0, %s252
      %s267 = sphi 0, %s253
      %s271 = sphi 0, %s271
      %s273 = sphi 0, %s271
      %s274 = sphi 0, %s273
      %s288 = sphi 0, %s274
      %s292 = sphi 0, %s292
      %s294 = sphi 0, %s292
      %s295 = sphi 0, %s294
      %s309 = sphi 0, %s295
      %s313 = sphi 0, %s313
      %s315 = sphi 0, %s313
      %s316 = sphi 0, %s315
      %s330 = sphi 0, %s316
    $region4: #{model_forward.3} parent=1 // loop_header_branch
      %23 = sbr.rel (%p21) target = $region8
    $region5: #{model_forward.3} parent=1 // loop_body
      %s25 = ssub.s32 %s20, 1
      %s26 = ssub.s32 %s20, 2
      %s33 = sadd.s32 1, %s28
      %p34 = scmp.ge.s32.totalorder %s33, 2
      %s35 = scalar_select %p34, 0, %s33
      %s36 = sadd.s32 1, %s27
      %s37 = scalar_select %p34, %s36, %s27
      %p38 = scmp.ge.s32.totalorder %s37, 1
      %s39 = scalar_select %p38, 0, %s37
      %s41 = sadd.s32 %s40, 1
      %p44 = scmp.eq.s32.totalorder %s20, 1
      %p45 = scmp.ne.s32.totalorder %s40, %s42
      %p46 = scmp.eq.s32.totalorder %s20, 0
      %p47 = por %p45, %p46
      %p48 = scmp.ne.s32.totalorder %s40, %s42
      %p49 = scmp.eq.s32.totalorder %s25, 1
      %p50 = por %p48, %p49
      %p51 = scmp.ne.s32.totalorder %s42, %s43
      %p52 = scmp.eq.s32.totalorder %s25, 0
      %p53 = por %p51, %p52
      %p54 = scmp.ne.s32.totalorder %s42, %s43
      %p55 = scmp.eq.s32.totalorder %s26, 1
      %p56 = por %p54, %p55
      %p58 = scmp.ne.s32.totalorder %s43, %s57
      %p59 = scmp.eq.s32.totalorder %s26, 0
      %p60 = por %p58, %p59
      %s62 = sadd.s32 %s61, 1
      %p65 = scmp.eq.s32.totalorder %s20, 1
      %p66 = scmp.ne.s32.totalorder %s61, %s63
      %p67 = scmp.eq.s32.totalorder %s20, 0
      %p68 = por %p66, %p67
      %p69 = scmp.ne.s32.totalorder %s61, %s63
      %p70 = scmp.eq.s32.totalorder %s25, 1
      %p71 = por %p69, %p70
      %p72 = scmp.ne.s32.totalorder %s63, %s64
      %p73 = scmp.eq.s32.totalorder %s25, 0
      %p74 = por %p72, %p73
      %p75 = scmp.ne.s32.totalorder %s63, %s64
      %p76 = scmp.eq.s32.totalorder %s26, 1
      %p77 = por %p75, %p76
      %p79 = scmp.ne.s32.totalorder %s64, %s78
      %p80 = scmp.eq.s32.totalorder %s26, 0
      %p81 = por %p79, %p80
      %s83 = sadd.s32 %s82, 1
      %p86 = scmp.eq.s32.totalorder %s20, 1
      %p87 = scmp.ne.s32.totalorder %s82, %s84
      %p88 = scmp.eq.s32.totalorder %s20, 0
      %p89 = por %p87, %p88
      %p90 = scmp.ne.s32.totalorder %s82, %s84
      %p91 = scmp.eq.s32.totalorder %s25, 1
      %p92 = por %p90, %p91
      %p93 = scmp.ne.s32.totalorder %s84, %s85
      %p94 = scmp.eq.s32.totalorder %s25, 0
      %p95 = por %p93, %p94
      %p96 = scmp.ne.s32.totalorder %s84, %s85
      %p97 = scmp.eq.s32.totalorder %s26, 1
      %p98 = por %p96, %p97
      %p100 = scmp.ne.s32.totalorder %s85, %s99
      %p101 = scmp.eq.s32.totalorder %s26, 0
      %p102 = por %p100, %p101
      %s104 = sadd.s32 %s103, 1
      %p107 = scmp.eq.s32.totalorder %s20, 1
      %p108 = scmp.ne.s32.totalorder %s103, %s105
      %p109 = scmp.eq.s32.totalorder %s20, 0
      %p110 = por %p108, %p109
      %p111 = scmp.ne.s32.totalorder %s103, %s105
      %p112 = scmp.eq.s32.totalorder %s25, 1
      %p113 = por %p111, %p112
      %p114 = scmp.ne.s32.totalorder %s105, %s106
      %p115 = scmp.eq.s32.totalorder %s25, 0
      %p116 = por %p114, %p115
      %p117 = scmp.ne.s32.totalorder %s105, %s106
      %p118 = scmp.eq.s32.totalorder %s26, 1
      %p119 = por %p117, %p118
      %p121 = scmp.ne.s32.totalorder %s106, %s120
      %p122 = scmp.eq.s32.totalorder %s26, 0
      %p123 = por %p121, %p122
      %s125 = sadd.s32 %s124, 1
      %p128 = scmp.eq.s32.totalorder %s20, 1
      %p129 = scmp.ne.s32.totalorder %s124, %s126
      %p130 = scmp.eq.s32.totalorder %s20, 0
      %p131 = por %p129, %p130
      %p132 = scmp.ne.s32.totalorder %s124, %s126
      %p133 = scmp.eq.s32.totalorder %s25, 1
      %p134 = por %p132, %p133
      %p135 = scmp.ne.s32.totalorder %s126, %s127
      %p136 = scmp.eq.s32.totalorder %s25, 0
      %p137 = por %p135, %p136
      %p138 = scmp.ne.s32.totalorder %s126, %s127
      %p139 = scmp.eq.s32.totalorder %s26, 1
      %p140 = por %p138, %p139
      %p142 = scmp.ne.s32.totalorder %s127, %s141
      %p143 = scmp.eq.s32.totalorder %s26, 0
      %p144 = por %p142, %p143
      %s146 = sadd.s32 %s145, 1
      %p149 = scmp.eq.s32.totalorder %s20, 1
      %p150 = scmp.ne.s32.totalorder %s145, %s147
      %p151 = scmp.eq.s32.totalorder %s20, 0
      %p152 = por %p150, %p151
      %p153 = scmp.ne.s32.totalorder %s145, %s147
      %p154 = scmp.eq.s32.totalorder %s25, 1
      %p155 = por %p153, %p154
      %p156 = scmp.ne.s32.totalorder %s147, %s148
      %p157 = scmp.eq.s32.totalorder %s25, 0
      %p158 = por %p156, %p157
      %p159 = scmp.ne.s32.totalorder %s147, %s148
      %p160 = scmp.eq.s32.totalorder %s26, 1
      %p161 = por %p159, %p160
      %p163 = scmp.ne.s32.totalorder %s148, %s162
      %p164 = scmp.eq.s32.totalorder %s26, 0
      %p165 = por %p163, %p164
      %s167 = sadd.s32 %s166, 1
      %p170 = scmp.eq.s32.totalorder %s20, 1
      %p171 = scmp.ne.s32.totalorder %s166, %s168
      %p172 = scmp.eq.s32.totalorder %s20, 0
      %p173 = por %p171, %p172
      %p174 = scmp.ne.s32.totalorder %s166, %s168
      %p175 = scmp.eq.s32.totalorder %s25, 1
      %p176 = por %p174, %p175
      %p177 = scmp.ne.s32.totalorder %s168, %s169
      %p178 = scmp.eq.s32.totalorder %s25, 0
      %p179 = por %p177, %p178
      %p180 = scmp.ne.s32.totalorder %s168, %s169
      %p181 = scmp.eq.s32.totalorder %s26, 1
      %p182 = por %p180, %p181
      %p184 = scmp.ne.s32.totalorder %s169, %s183
      %p185 = scmp.eq.s32.totalorder %s26, 0
      %p186 = por %p184, %p185
      %s188 = sadd.s32 %s187, 1
      %p191 = scmp.eq.s32.totalorder %s20, 1
      %p192 = scmp.ne.s32.totalorder %s187, %s189
      %p193 = scmp.eq.s32.totalorder %s20, 0
      %p194 = por %p192, %p193
      %p195 = scmp.ne.s32.totalorder %s187, %s189
      %p196 = scmp.eq.s32.totalorder %s25, 1
      %p197 = por %p195, %p196
      %p198 = scmp.ne.s32.totalorder %s189, %s190
      %p199 = scmp.eq.s32.totalorder %s25, 0
      %p200 = por %p198, %p199
      %p201 = scmp.ne.s32.totalorder %s189, %s190
      %p202 = scmp.eq.s32.totalorder %s26, 1
      %p203 = por %p201, %p202
      %p205 = scmp.ne.s32.totalorder %s190, %s204
      %p206 = scmp.eq.s32.totalorder %s26, 0
      %p207 = por %p205, %p206
      %s209 = sadd.s32 %s208, 1
      %p212 = scmp.eq.s32.totalorder %s20, 1
      %p213 = scmp.ne.s32.totalorder %s208, %s210
      %p214 = scmp.eq.s32.totalorder %s20, 0
      %p215 = por %p213, %p214
      %p216 = scmp.ne.s32.totalorder %s208, %s210
      %p217 = scmp.eq.s32.totalorder %s25, 1
      %p218 = por %p216, %p217
      %p219 = scmp.ne.s32.totalorder %s210, %s211
      %p220 = scmp.eq.s32.totalorder %s25, 0
      %p221 = por %p219, %p220
      %p222 = scmp.ne.s32.totalorder %s210, %s211
      %p223 = scmp.eq.s32.totalorder %s26, 1
      %p224 = por %p222, %p223
      %p226 = scmp.ne.s32.totalorder %s211, %s225
      %p227 = scmp.eq.s32.totalorder %s26, 0
      %p228 = por %p226, %p227
      %s230 = sadd.s32 %s229, 1
      %p233 = scmp.eq.s32.totalorder %s20, 1
      %p234 = scmp.ne.s32.totalorder %s229, %s231
      %p235 = scmp.eq.s32.totalorder %s20, 0
      %p236 = por %p234, %p235
      %p237 = scmp.ne.s32.totalorder %s229, %s231
      %p238 = scmp.eq.s32.totalorder %s25, 1
      %p239 = por %p237, %p238
      %p240 = scmp.ne.s32.totalorder %s231, %s232
      %p241 = scmp.eq.s32.totalorder %s25, 0
      %p242 = por %p240, %p241
      %p243 = scmp.ne.s32.totalorder %s231, %s232
      %p244 = scmp.eq.s32.totalorder %s26, 1
      %p245 = por %p243, %p244
      %p247 = scmp.ne.s32.totalorder %s232, %s246
      %p248 = scmp.eq.s32.totalorder %s26, 0
      %p249 = por %p247, %p248
      %s251 = sadd.s32 %s250, 1
      %p254 = scmp.eq.s32.totalorder %s20, 1
      %p255 = scmp.ne.s32.totalorder %s250, %s252
      %p256 = scmp.eq.s32.totalorder %s20, 0
      %p257 = por %p255, %p256
      %p258 = scmp.ne.s32.totalorder %s250, %s252
      %p259 = scmp.eq.s32.totalorder %s25, 1
      %p260 = por %p258, %p259
      %p261 = scmp.ne.s32.totalorder %s252, %s253
      %p262 = scmp.eq.s32.totalorder %s25, 0
      %p263 = por %p261, %p262
      %p264 = scmp.ne.s32.totalorder %s252, %s253
      %p265 = scmp.eq.s32.totalorder %s26, 1
      %p266 = por %p264, %p265
      %p268 = scmp.ne.s32.totalorder %s253, %s267
      %p269 = scmp.eq.s32.totalorder %s26, 0
      %p270 = por %p268, %p269
      %s272 = sadd.s32 %s271, 1
      %p275 = scmp.eq.s32.totalorder %s20, 1
      %p276 = scmp.ne.s32.totalorder %s271, %s273
      %p277 = scmp.eq.s32.totalorder %s20, 0
      %p278 = por %p276, %p277
      %p279 = scmp.ne.s32.totalorder %s271, %s273
      %p280 = scmp.eq.s32.totalorder %s25, 1
      %p281 = por %p279, %p280
      %p282 = scmp.ne.s32.totalorder %s273, %s274
      %p283 = scmp.eq.s32.totalorder %s25, 0
      %p284 = por %p282, %p283
      %p285 = scmp.ne.s32.totalorder %s273, %s274
      %p286 = scmp.eq.s32.totalorder %s26, 1
      %p287 = por %p285, %p286
      %p289 = scmp.ne.s32.totalorder %s274, %s288
      %p290 = scmp.eq.s32.totalorder %s26, 0
      %p291 = por %p289, %p290
      %s293 = sadd.s32 %s292, 1
      %p296 = scmp.eq.s32.totalorder %s20, 1
      %p297 = scmp.ne.s32.totalorder %s292, %s294
      %p298 = scmp.eq.s32.totalorder %s20, 0
      %p299 = por %p297, %p298
      %p300 = scmp.ne.s32.totalorder %s292, %s294
      %p301 = scmp.eq.s32.totalorder %s25, 1
      %p302 = por %p300, %p301
      %p303 = scmp.ne.s32.totalorder %s294, %s295
      %p304 = scmp.eq.s32.totalorder %s25, 0
      %p305 = por %p303, %p304
      %p306 = scmp.ne.s32.totalorder %s294, %s295
      %p307 = scmp.eq.s32.totalorder %s26, 1
      %p308 = por %p306, %p307
      %p310 = scmp.ne.s32.totalorder %s295, %s309
      %p311 = scmp.eq.s32.totalorder %s26, 0
      %p312 = por %p310, %p311
      %s314 = sadd.s32 %s313, 1
      %p317 = scmp.eq.s32.totalorder %s20, 1
      %p318 = scmp.ne.s32.totalorder %s313, %s315
      %p319 = scmp.eq.s32.totalorder %s20, 0
      %p320 = por %p318, %p319
      %p321 = scmp.ne.s32.totalorder %s313, %s315
      %p322 = scmp.eq.s32.totalorder %s25, 1
      %p323 = por %p321, %p322
      %p324 = scmp.ne.s32.totalorder %s315, %s316
      %p325 = scmp.eq.s32.totalorder %s25, 0
      %p326 = por %p324, %p325
      %p327 = scmp.ne.s32.totalorder %s315, %s316
      %p328 = scmp.eq.s32.totalorder %s26, 1
      %p329 = por %p327, %p328
      %p331 = scmp.ne.s32.totalorder %s316, %s330
      %p332 = scmp.eq.s32.totalorder %s26, 0
      %p333 = por %p331, %p332
      %p334 = scmp.le.s32.totalorder 1, %s20
      %p335 = scmp.lt.s32.totalorder %s20, 3
      %p336 = pnand %p334, %p335
      %p337 = pneg %p336
      // Predicated region
      $region9: #{model_forward.3} parent=5 // pred_check
        _
      $region10: #{model_forward.3} parent=5 // pred_check_branch
        %339 = sbr.rel (%p336) target = $region12
      $region11: #{model_forward.3} parent=5 // pred_region
        %s340 = ssub.s32 %s20, 1
        // Predicated region
        $region13: #{model_forward.3} parent=11 // pred_check
          %p341 = pneg %p53
        $region14: #{model_forward.3} parent=11 // pred_check_branch
          %343 = sbr.rel (%p341) target = $region16
        $region15: #{model_forward.3} parent=11 // pred_region
          _
        $region16: #{model_forward.3} parent=11 // pred_fallthru
          _
        // Predicated region
        $region17: #{model_forward.3} parent=11 // pred_check
          %p344 = pneg %p74
        $region18: #{model_forward.3} parent=11 // pred_check_branch
          %346 = sbr.rel (%p344) target = $region20
        $region19: #{model_forward.3} parent=11 // pred_region
          _
        $region20: #{model_forward.3} parent=11 // pred_fallthru
          _
        // Predicated region
        $region21: #{model_forward.3} parent=11 // pred_check
          %p347 = pneg %p95
        $region22: #{model_forward.3} parent=11 // pred_check_branch
          %349 = sbr.rel (%p347) target = $region24
        $region23: #{model_forward.3} parent=11 // pred_region
          _
        $region24: #{model_forward.3} parent=11 // pred_fallthru
          _
        // Predicated region
        $region25: #{model_forward.3} parent=11 // pred_check
          %p350 = pneg %p116
        $region26: #{model_forward.3} parent=11 // pred_check_branch
          %352 = sbr.rel (%p350) target = $region28
        $region27: #{model_forward.3} parent=11 // pred_region
          _
        $region28: #{model_forward.3} parent=11 // pred_fallthru
          _
        // Predicated region
        $region29: #{model_forward.3} parent=11 // pred_check
          %p353 = pneg %p137
        $region30: #{model_forward.3} parent=11 // pred_check_branch
          %355 = sbr.rel (%p353) target = $region32
        $region31: #{model_forward.3} parent=11 // pred_region
          _
        $region32: #{model_forward.3} parent=11 // pred_fallthru
          _
        // Predicated region
        $region33: #{model_forward.3} parent=11 // pred_check
          %p356 = pneg %p158
        $region34: #{model_forward.3} parent=11 // pred_check_branch
          %358 = sbr.rel (%p356) target = $region36
        $region35: #{model_forward.3} parent=11 // pred_region
          _
        $region36: #{model_forward.3} parent=11 // pred_fallthru
          _
        // Predicated region
        $region37: #{model_forward.3} parent=11 // pred_check
          %p359 = pneg %p179
        $region38: #{model_forward.3} parent=11 // pred_check_branch
          %361 = sbr.rel (%p359) target = $region40
        $region39: #{model_forward.3} parent=11 // pred_region
          _
        $region40: #{model_forward.3} parent=11 // pred_fallthru
          _
        // Predicated region
        $region41: #{model_forward.3} parent=11 // pred_check
          %p362 = pneg %p200
        $region42: #{model_forward.3} parent=11 // pred_check_branch
          %364 = sbr.rel (%p362) target = $region44
        $region43: #{model_forward.3} parent=11 // pred_region
          _
        $region44: #{model_forward.3} parent=11 // pred_fallthru
          _
        // Predicated region
        $region45: #{model_forward.3} parent=11 // pred_check
          %p365 = pneg %p221
        $region46: #{model_forward.3} parent=11 // pred_check_branch
          %367 = sbr.rel (%p365) target = $region48
        $region47: #{model_forward.3} parent=11 // pred_region
          _
        $region48: #{model_forward.3} parent=11 // pred_fallthru
          _
        // Predicated region
        $region49: #{model_forward.3} parent=11 // pred_check
          %p368 = pneg %p242
        $region50: #{model_forward.3} parent=11 // pred_check_branch
          %370 = sbr.rel (%p368) target = $region52
        $region51: #{model_forward.3} parent=11 // pred_region
          _
        $region52: #{model_forward.3} parent=11 // pred_fallthru
          _
        // Predicated region
        $region53: #{model_forward.3} parent=11 // pred_check
          %p371 = pneg %p263
        $region54: #{model_forward.3} parent=11 // pred_check_branch
          %373 = sbr.rel (%p371) target = $region56
        $region55: #{model_forward.3} parent=11 // pred_region
          _
        $region56: #{model_forward.3} parent=11 // pred_fallthru
          _
        // Predicated region
        $region57: #{model_forward.3} parent=11 // pred_check
          %p374 = pneg %p284
        $region58: #{model_forward.3} parent=11 // pred_check_branch
          %376 = sbr.rel (%p374) target = $region60
        $region59: #{model_forward.3} parent=11 // pred_region
          _
        $region60: #{model_forward.3} parent=11 // pred_fallthru
          _
        // Predicated region
        $region61: #{model_forward.3} parent=11 // pred_check
          %p377 = pneg %p305
        $region62: #{model_forward.3} parent=11 // pred_check_branch
          %379 = sbr.rel (%p377) target = $region64
        $region63: #{model_forward.3} parent=11 // pred_region
          _
        $region64: #{model_forward.3} parent=11 // pred_fallthru
          _
      $region12: #{model_forward.3} parent=5 // pred_fallthru
        _
      %p380 = scmp.lt.s32.totalorder %s20, 2
      // Predicated region
      $region65: #{model_forward.3} parent=5 // pred_check
        %p381 = pneg %p380
      $region66: #{model_forward.3} parent=5 // pred_check_branch
        %383 = sbr.rel (%p381) target = $region68
      $region67: #{model_forward.3} parent=5 // pred_region
        _
      $region68: #{model_forward.3} parent=5 // pred_fallthru
        _
      %p384 = scmp.le.s32.totalorder 1, %s20
      %p385 = scmp.lt.s32.totalorder %s20, 3
      %p386 = pnand %p384, %p385
      %p387 = pneg %p386
      // Predicated region
      $region69: #{model_forward.3} parent=5 // pred_check
        _
      $region70: #{model_forward.3} parent=5 // pred_check_branch
        %389 = sbr.rel (%p386) target = $region72
      $region71: #{model_forward.3} parent=5 // pred_region
        %s390 = ssub.s32 %s20, 1
        %p391 = pneg %p53
        %p392 = pneg %p50
        %p393 = pneg %p74
        %p394 = pneg %p71
        %p395 = pneg %p95
        %p396 = pneg %p92
        %p397 = pneg %p116
        %p398 = pneg %p113
        %p399 = pneg %p137
        %p400 = pneg %p134
        %p401 = pneg %p158
        %p402 = pneg %p155
        %p403 = pneg %p179
        %p404 = pneg %p176
        %p405 = pneg %p200
        %p406 = pneg %p197
        %p407 = pneg %p221
        %p408 = pneg %p218
        %p409 = pneg %p242
        %p410 = pneg %p239
        %p411 = pneg %p263
        %p412 = pneg %p260
        %p413 = pneg %p284
        %p414 = pneg %p281
        %p415 = pneg %p305
        %p416 = pneg %p302
        %p417 = pneg %p326
        %p418 = pneg %p323
        %p420 = scmp.eq.s32.totalorder %s29, 0
        %p421 = scmp.eq.s32.totalorder %s30, 0
        %p422 = pnand %p420, %p421
        %p423 = pneg %p422
        // Predicated region
        $region73: #{model_forward.3} parent=71 // pred_check
          _
        $region74: #{model_forward.3} parent=71 // pred_check_branch
          %425 = sbr.rel (%p422) target = $region76
        $region75: #{model_forward.3} parent=71 // pred_region
          %426 = vst [vmem:[#allocation2] sm:$0xff] 0.0
          %427 = vst [vmem:[#allocation2 + $0x8] sm:$0xff] 0.0
        $region76: #{model_forward.3} parent=71 // pred_fallthru
          _
        %s428 = sadd.s32 %s30, 1
        %v429 = vld [vmem:[#allocation2] sm:$0xff]
        %v430 = vld [vmem:[#allocation2 + $0x8] sm:$0xff]
        %v431 = vpack.c.bf16 %v430, %v429
        %v432 = vld [vmem:[%s0] sm:$0xff]
        %v433 = vld [vmem:[%s0 + $0x8] sm:$0xff]
        %v434 = vld [vmem:[%s1] sm:$0xff]
        %v435 = vld [vmem:[%s1 + $0x8] sm:$0xff]
        %v436 = vld [vmem:[%s3] sm:$0xff]
        %v437 = vld [vmem:[%s3 + $0x8] sm:$0xff]
        %v438 = vunpack.c.l.bf16 %v436
        %v439 = vunpack.c.h.bf16 %v436
        %v440 = vunpack.c.l.bf16 %v437
        %v441 = vunpack.c.h.bf16 %v437
        %v442 = vld [vmem:[%s4] sm:$0xff]
        %v443 = vld [vmem:[%s4 + $0x8] sm:$0xff]
        %v444 = vld [vmem:[%s4 + $0x10] sm:$0xff]
        %v445 = vld [vmem:[%s4 + $0x18] sm:$0xff]
        %v446 = vld [vmem:[%s4 + $0x20] sm:$0xff]
        %v447 = vld [vmem:[%s4 + $0x28] sm:$0xff]
        %v448 = vld [vmem:[%s4 + $0x30] sm:$0xff]
        %v449 = vld [vmem:[%s4 + $0x38] sm:$0xff]
        %v450 = vld [vmem:[%s4 + $0x40] sm:$0xff]
        %v451 = vld [vmem:[%s4 + $0x48] sm:$0xff]
        %v452 = vld [vmem:[%s4 + $0x50] sm:$0xff]
        %v453 = vld [vmem:[%s4 + $0x58] sm:$0xff]
        %v454 = vld [vmem:[%s4 + $0x60] sm:$0xff]
        %v455 = vld [vmem:[%s4 + $0x68] sm:$0xff]
        %v456 = vld [vmem:[%s4 + $0x70] sm:$0xff]
        %v457 = vld [vmem:[%s4 + $0x78] sm:$0xff]
        %v474 = vunpack.c.l.b16 %v442
        %v475 = vunpack.c.h.b16 %v442
        %v476 = vunpack.c.l.b16 %v443
        %v477 = vunpack.c.h.b16 %v443
        %v478 = vunpack.c.l.b16 %v444
        %v479 = vunpack.c.h.b16 %v444
        %v480 = vunpack.c.l.b16 %v445
        %v481 = vunpack.c.h.b16 %v445
        %v482 = vunpack.c.l.b16 %v446
        %v483 = vunpack.c.h.b16 %v446
        %v484 = vunpack.c.l.b16 %v447
        %v485 = vunpack.c.h.b16 %v447
        %v486 = vunpack.c.l.b16 %v448
        %v487 = vunpack.c.h.b16 %v448
        %v488 = vunpack.c.l.b16 %v449
        %v489 = vunpack.c.h.b16 %v449
        %v490 = vunpack.c.l.b16 %v450
        %v491 = vunpack.c.h.b16 %v450
        %v492 = vunpack.c.l.b16 %v451
        %v493 = vunpack.c.h.b16 %v451
        %v494 = vunpack.c.l.b16 %v452
        %v495 = vunpack.c.h.b16 %v452
        %v496 = vunpack.c.l.b16 %v453
        %v497 = vunpack.c.h.b16 %v453
        %v498 = vunpack.c.l.b16 %v454
        %v499 = vunpack.c.h.b16 %v454
        %v500 = vunpack.c.l.b16 %v455
        %v501 = vunpack.c.h.b16 %v455
        %v502 = vunpack.c.l.b16 %v456
        %v503 = vunpack.c.h.b16 %v456
        %v504 = vunpack.c.l.b16 %v457
        %v505 = vunpack.c.h.b16 %v457
        %v506 = vpack.c.b16 %v476, %v474
        %v507 = vpack.c.b16 %v477, %v475
        %v508 = vpack.c.b16 %v480, %v478
        %v509 = vpack.c.b16 %v481, %v479
        %v510 = vpack.c.b16 %v484, %v482
        %v511 = vpack.c.b16 %v485, %v483
        %v512 = vpack.c.b16 %v488, %v486
        %v513 = vpack.c.b16 %v489, %v487
        %v514 = vpack.c.b16 %v492, %v490
        %v515 = vpack.c.b16 %v493, %v491
        %v516 = vpack.c.b16 %v496, %v494
        %v517 = vpack.c.b16 %v497, %v495
        %v518 = vpack.c.b16 %v500, %v498
        %v519 = vpack.c.b16 %v501, %v499
        %v520 = vpack.c.b16 %v504, %v502
        %v521 = vpack.c.b16 %v505, %v503
        %538 = vmatprep.subr.bf16.mxu0 %v521
        %539 = vmatpush1.bf16.msra.mxu0 %v520
        %540 = vmatprep.subr.bf16.mxu0 %v519
        %541 = vmatpush1.bf16.msra.mxu0 %v518
        %542 = vmatprep.subr.bf16.mxu0 %v517
        %543 = vmatpush1.bf16.msra.mxu0 %v516
        %544 = vmatprep.subr.bf16.mxu0 %v515
        %545 = vmatpush1.bf16.msra.mxu0 %v514
        %546 = vmatprep.subr.bf16.mxu0 %v513
        %547 = vmatpush1.bf16.msra.mxu0 %v512
        %548 = vmatprep.subr.bf16.mxu0 %v511
        %549 = vmatpush1.bf16.msra.mxu0 %v510
        %550 = vmatprep.subr.bf16.mxu0 %v509
        %551 = vmatpush1.bf16.msra.mxu0 %v508
        %552 = vmatprep.subr.bf16.mxu0 %v507
        %553 = vmatpush1.bf16.msra.mxu0 %v506
        %554 = vmatprep.subr.bf16.mxu0 0
        %555 = vmatpush2.bf16.msra.mxu0 0
        %556 = vmatprep.subr.bf16.mxu0 0
        %557 = vmatpush2.bf16.msra.mxu0 0
        %558 = vmatprep.subr.bf16.mxu0 0
        %559 = vmatpush2.bf16.msra.mxu0 0
        %560 = vmatprep.subr.bf16.mxu0 0
        %561 = vmatpush2.bf16.msra.mxu0 0
        %562 = vmatprep.subr.bf16.mxu0 0
        %563 = vmatpush2.bf16.msra.mxu0 0
        %564 = vmatprep.subr.bf16.mxu0 0
        %565 = vmatpush2.bf16.msra.mxu0 0
        %566 = vmatprep.subr.bf16.mxu0 0
        %567 = vmatpush2.bf16.msra.mxu0 0
        %568 = vmatprep.subr.bf16.mxu0 0
        %569 = vmatpush2.bf16.msra.mxu0 0
        %570 = vmatprep.mubr.bf16.mxu0 0
        %571 = vmatmul.mubr.bf16.gmra.mxu0 %v431
        %v572 = vpop.f32.mrf.mxu0
        %v573 = vadd.f32 0.0, %v572
        %v574 = vpop.f32.mrf.mxu0
        %v575 = vadd.f32 0.0, %v574
        %v576 = vpop.f32.mrf.mxu0
        %v577 = vadd.f32 0.0, %v576
        %v578 = vpop.f32.mrf.mxu0
        %v579 = vadd.f32 0.0, %v578
        %580 = vdwg.mxu0
        %v581 = vadd.f32 %v438, %v573
        %v582 = vadd.f32 %v439, %v575
        %v583 = vadd.f32 %v440, %v577
        %v584 = vadd.f32 %v441, %v579
        %v585 = vmax.f32 %v581, 0.0
        %v586 = vmax.f32 %v582, 0.0
        %v587 = vmax.f32 %v583, 0.0
        %v588 = vmax.f32 %v584, 0.0
        %v589 = vpack.c.bf16 %v587, %v585
        %v590 = vld [vmem:[%s5] sm:$0xf]
        %v591 = vld [vmem:[%s5 + $0x4] sm:$0xf]
        %v592 = vld [vmem:[%s5 + $0x8] sm:$0xf]
        %v593 = vld [vmem:[%s5 + $0xc] sm:$0xf]
        %v594 = vld [vmem:[%s5 + $0x10] sm:$0xf]
        %v595 = vld [vmem:[%s5 + $0x14] sm:$0xf]
        %v596 = vld [vmem:[%s5 + $0x18] sm:$0xf]
        %v597 = vld [vmem:[%s5 + $0x1c] sm:$0xf]
        %v598 = vld [vmem:[%s5 + $0x20] sm:$0xf]
        %v599 = vld [vmem:[%s5 + $0x24] sm:$0xf]
        %v600 = vld [vmem:[%s5 + $0x28] sm:$0xf]
        %v601 = vld [vmem:[%s5 + $0x2c] sm:$0xf]
        %v602 = vld [vmem:[%s5 + $0x30] sm:$0xf]
        %v603 = vld [vmem:[%s5 + $0x34] sm:$0xf]
        %v604 = vld [vmem:[%s5 + $0x38] sm:$0xf]
        %v605 = vld [vmem:[%s5 + $0x3c] sm:$0xf]
        %v606 = vld [vmem:[%s6] sm:$0x1]
        %v608 = vlaneseq
        %v609 = vshrl.u32 %v608, 7
        %v610 = vsub.s32 0, %v609
        %v611 = vrot.slane %v606, %v610
        %v629 = vunpack.c.l.b16 %v590
        %v630 = vunpack.c.l.b16 %v591
        %v631 = vunpack.c.l.b16 %v592
        %v632 = vunpack.c.l.b16 %v593
        %v633 = vunpack.c.l.b16 %v594
        %v634 = vunpack.c.l.b16 %v595
        %v635 = vunpack.c.l.b16 %v596
        %v636 = vunpack.c.l.b16 %v597
        %v637 = vunpack.c.l.b16 %v598
        %v638 = vunpack.c.l.b16 %v599
        %v639 = vunpack.c.l.b16 %v600
        %v640 = vunpack.c.l.b16 %v601
        %v641 = vunpack.c.l.b16 %v602
        %v642 = vunpack.c.l.b16 %v603
        %v643 = vunpack.c.l.b16 %v604
        %v644 = vunpack.c.l.b16 %v605
        %v645 = vpack.c.b16 %v630, %v629
        %v646 = vpack.c.b16 %v632, %v631
        %v647 = vpack.c.b16 %v634, %v633
        %v648 = vpack.c.b16 %v636, %v635
        %v649 = vpack.c.b16 %v638, %v637
        %v650 = vpack.c.b16 %v640, %v639
        %v651 = vpack.c.b16 %v642, %v641
        %v652 = vpack.c.b16 %v644, %v643
        %661 = vmatprep.subr.bf16.mxu0 0
        %662 = vmatpush1.bf16.msra.mxu0 %v652
        %663 = vmatprep.subr.bf16.mxu0 0
        %664 = vmatpush1.bf16.msra.mxu0 %v651
        %665 = vmatprep.subr.bf16.mxu0 0
        %666 = vmatpush1.bf16.msra.mxu0 %v650
        %667 = vmatprep.subr.bf16.mxu0 0
        %668 = vmatpush1.bf16.msra.mxu0 %v649
        %669 = vmatprep.subr.bf16.mxu0 0
        %670 = vmatpush1.bf16.msra.mxu0 %v648
        %671 = vmatprep.subr.bf16.mxu0 0
        %672 = vmatpush1.bf16.msra.mxu0 %v647
        %673 = vmatprep.subr.bf16.mxu0 0
        %674 = vmatpush1.bf16.msra.mxu0 %v646
        %675 = vmatprep.subr.bf16.mxu0 0
        %676 = vmatpush1.bf16.msra.mxu0 %v645
        %677 = vmatprep.subr.bf16.mxu0 0
        %678 = vmatpush2.bf16.msra.mxu0 0
        %679 = vmatprep.subr.bf16.mxu0 0
        %680 = vmatpush2.bf16.msra.mxu0 0
        %681 = vmatprep.subr.bf16.mxu0 0
        %682 = vmatpush2.bf16.msra.mxu0 0
        %683 = vmatprep.subr.bf16.mxu0 0
        %684 = vmatpush2.bf16.msra.mxu0 0
        %685 = vmatprep.subr.bf16.mxu0 0
        %686 = vmatpush2.bf16.msra.mxu0 0
        %687 = vmatprep.subr.bf16.mxu0 0
        %688 = vmatpush2.bf16.msra.mxu0 0
        %689 = vmatprep.subr.bf16.mxu0 0
        %690 = vmatpush2.bf16.msra.mxu0 0
        %691 = vmatprep.subr.bf16.mxu0 0
        %692 = vmatpush2.bf16.msra.mxu0 0
        %693 = vmatprep.mubr.bf16.mxu0 0
        %694 = vmatmul.mubr.bf16.gmra.mxu0 %v589
        %v695 = vpop.f32.mrf.mxu0
        %v696 = vadd.f32 %v611, %v695
        %v697 = vpop.f32.mrf.mxu0
        %v698 = vpop.f32.mrf.mxu0
        %v699 = vadd.f32 %v611, %v698
        %v700 = vpop.f32.mrf.mxu0
        %701 = vdwg.mxu0
        %v702 = vmax.f32 %v696, 0.0
        %v703 = vmax.f32 %v699, 0.0
        %v704 = vpack.c.bf16 %v703, %v702
        %v705 = vld [vmem:[%s7] sm:$0xf]
        %v706 = vld [vmem:[%s7 + $0x4] sm:$0xf]
        %v707 = vld [vmem:[%s7 + $0x8] sm:$0xf]
        %v708 = vld [vmem:[%s7 + $0xc] sm:$0xf]
        %v709 = vld [vmem:[%s7 + $0x10] sm:$0xf]
        %v710 = vld [vmem:[%s7 + $0x14] sm:$0xf]
        %v711 = vld [vmem:[%s7 + $0x18] sm:$0xf]
        %v712 = vld [vmem:[%s7 + $0x1c] sm:$0xf]
        %v713 = vld [vmem:[%s7 + $0x20] sm:$0xf]
        %v714 = vld [vmem:[%s7 + $0x24] sm:$0xf]
        %v715 = vld [vmem:[%s7 + $0x28] sm:$0xf]
        %v716 = vld [vmem:[%s7 + $0x2c] sm:$0xf]
        %v717 = vld [vmem:[%s7 + $0x30] sm:$0xf]
        %v718 = vld [vmem:[%s7 + $0x34] sm:$0xf]
        %v719 = vld [vmem:[%s7 + $0x38] sm:$0xf]
        %v720 = vld [vmem:[%s7 + $0x3c] sm:$0xf]
        %v721 = vld [vmem:[%s8] sm:$0x1]
        %v723 = vlaneseq
        %v724 = vshrl.u32 %v723, 7
        %v725 = vsub.s32 0, %v724
        %v726 = vrot.slane %v721, %v725
        %v744 = vunpack.c.l.b16 %v705
        %v745 = vunpack.c.l.b16 %v706
        %v746 = vunpack.c.l.b16 %v707
        %v747 = vunpack.c.l.b16 %v708
        %v748 = vunpack.c.l.b16 %v709
        %v749 = vunpack.c.l.b16 %v710
        %v750 = vunpack.c.l.b16 %v711
        %v751 = vunpack.c.l.b16 %v712
        %v752 = vunpack.c.l.b16 %v713
        %v753 = vunpack.c.l.b16 %v714
        %v754 = vunpack.c.l.b16 %v715
        %v755 = vunpack.c.l.b16 %v716
        %v756 = vunpack.c.l.b16 %v717
        %v757 = vunpack.c.l.b16 %v718
        %v758 = vunpack.c.l.b16 %v719
        %v759 = vunpack.c.l.b16 %v720
        %v760 = vpack.c.b16 %v745, %v744
        %v761 = vpack.c.b16 %v747, %v746
        %v762 = vpack.c.b16 %v749, %v748
        %v763 = vpack.c.b16 %v751, %v750
        %v764 = vpack.c.b16 %v753, %v752
        %v765 = vpack.c.b16 %v755, %v754
        %v766 = vpack.c.b16 %v757, %v756
        %v767 = vpack.c.b16 %v759, %v758
        %776 = vmatprep.subr.bf16.mxu0 0
        %777 = vmatpush1.bf16.msra.mxu0 %v767
        %778 = vmatprep.subr.bf16.mxu0 0
        %779 = vmatpush1.bf16.msra.mxu0 %v766
        %780 = vmatprep.subr.bf16.mxu0 0
        %781 = vmatpush1.bf16.msra.mxu0 %v765
        %782 = vmatprep.subr.bf16.mxu0 0
        %783 = vmatpush1.bf16.msra.mxu0 %v764
        %784 = vmatprep.subr.bf16.mxu0 0
        %785 = vmatpush1.bf16.msra.mxu0 %v763
        %786 = vmatprep.subr.bf16.mxu0 0
        %787 = vmatpush1.bf16.msra.mxu0 %v762
        %788 = vmatprep.subr.bf16.mxu0 0
        %789 = vmatpush1.bf16.msra.mxu0 %v761
        %790 = vmatprep.subr.bf16.mxu0 0
        %791 = vmatpush1.bf16.msra.mxu0 %v760
        %792 = vmatprep.subr.bf16.mxu0 0
        %793 = vmatpush2.bf16.msra.mxu0 0
        %794 = vmatprep.subr.bf16.mxu0 0
        %795 = vmatpush2.bf16.msra.mxu0 0
        %796 = vmatprep.subr.bf16.mxu0 0
        %797 = vmatpush2.bf16.msra.mxu0 0
        %798 = vmatprep.subr.bf16.mxu0 0
        %799 = vmatpush2.bf16.msra.mxu0 0
        %800 = vmatprep.subr.bf16.mxu0 0
        %801 = vmatpush2.bf16.msra.mxu0 0
        %802 = vmatprep.subr.bf16.mxu0 0
        %803 = vmatpush2.bf16.msra.mxu0 0
        %804 = vmatprep.subr.bf16.mxu0 0
        %805 = vmatpush2.bf16.msra.mxu0 0
        %806 = vmatprep.subr.bf16.mxu0 0
        %807 = vmatpush2.bf16.msra.mxu0 0
        %808 = vmatprep.mubr.bf16.mxu0 0
        %809 = vmatmul.mubr.bf16.gmra.mxu0 %v704
        %v810 = vpop.f32.mrf.mxu0
        %v811 = vadd.f32 %v726, %v810
        %v812 = vpop.f32.mrf.mxu0
        %v813 = vpop.f32.mrf.mxu0
        %v814 = vadd.f32 %v726, %v813
        %v815 = vpop.f32.mrf.mxu0
        %816 = vdwg.mxu0
        %v817 = vpack.c.bf16 %v588, %v586
        %s818 = scalar_lea.vmem %s5, 64
        %v819 = vld [vmem:[%s818] sm:$0xf]
        %v820 = vld [vmem:[%s818 + $0x4] sm:$0xf]
        %v821 = vld [vmem:[%s818 + $0x8] sm:$0xf]
        %v822 = vld [vmem:[%s818 + $0xc] sm:$0xf]
        %v823 = vld [vmem:[%s818 + $0x10] sm:$0xf]
        %v824 = vld [vmem:[%s818 + $0x14] sm:$0xf]
        %v825 = vld [vmem:[%s818 + $0x18] sm:$0xf]
        %v826 = vld [vmem:[%s818 + $0x1c] sm:$0xf]
        %v827 = vld [vmem:[%s818 + $0x20] sm:$0xf]
        %v828 = vld [vmem:[%s818 + $0x24] sm:$0xf]
        %v829 = vld [vmem:[%s818 + $0x28] sm:$0xf]
        %v830 = vld [vmem:[%s818 + $0x2c] sm:$0xf]
        %v831 = vld [vmem:[%s818 + $0x30] sm:$0xf]
        %v832 = vld [vmem:[%s818 + $0x34] sm:$0xf]
        %v833 = vld [vmem:[%s818 + $0x38] sm:$0xf]
        %v834 = vld [vmem:[%s818 + $0x3c] sm:$0xf]
        %s835 = scalar_lea.vmem %s6, 1
        %v836 = vld [vmem:[%s835] sm:$0x1]
        %v838 = vlaneseq
        %v839 = vshrl.u32 %v838, 7
        %v840 = vsub.s32 0, %v839
        %v841 = vrot.slane %v836, %v840
        %v859 = vunpack.c.l.b16 %v819
        %v860 = vunpack.c.l.b16 %v820
        %v861 = vunpack.c.l.b16 %v821
        %v862 = vunpack.c.l.b16 %v822
        %v863 = vunpack.c.l.b16 %v823
        %v864 = vunpack.c.l.b16 %v824
        %v865 = vunpack.c.l.b16 %v825
        %v866 = vunpack.c.l.b16 %v826
        %v867 = vunpack.c.l.b16 %v827
        %v868 = vunpack.c.l.b16 %v828
        %v869 = vunpack.c.l.b16 %v829
        %v870 = vunpack.c.l.b16 %v830
        %v871 = vunpack.c.l.b16 %v831
        %v872 = vunpack.c.l.b16 %v832
        %v873 = vunpack.c.l.b16 %v833
        %v874 = vunpack.c.l.b16 %v834
        %v875 = vpack.c.b16 %v860, %v859
        %v876 = vpack.c.b16 %v862, %v861
        %v877 = vpack.c.b16 %v864, %v863
        %v878 = vpack.c.b16 %v866, %v865
        %v879 = vpack.c.b16 %v868, %v867
        %v880 = vpack.c.b16 %v870, %v869
        %v881 = vpack.c.b16 %v872, %v871
        %v882 = vpack.c.b16 %v874, %v873
        %891 = vmatprep.subr.bf16.mxu0 0
        %892 = vmatpush1.bf16.msra.mxu0 %v882
        %893 = vmatprep.subr.bf16.mxu0 0
        %894 = vmatpush1.bf16.msra.mxu0 %v881
        %895 = vmatprep.subr.bf16.mxu0 0
        %896 = vmatpush1.bf16.msra.mxu0 %v880
        %897 = vmatprep.subr.bf16.mxu0 0
        %898 = vmatpush1.bf16.msra.mxu0 %v879
        %899 = vmatprep.subr.bf16.mxu0 0
        %900 = vmatpush1.bf16.msra.mxu0 %v878
        %901 = vmatprep.subr.bf16.mxu0 0
        %902 = vmatpush1.bf16.msra.mxu0 %v877
        %903 = vmatprep.subr.bf16.mxu0 0
        %904 = vmatpush1.bf16.msra.mxu0 %v876
        %905 = vmatprep.subr.bf16.mxu0 0
        %906 = vmatpush1.bf16.msra.mxu0 %v875
        %907 = vmatprep.subr.bf16.mxu0 0
        %908 = vmatpush2.bf16.msra.mxu0 0
        %909 = vmatprep.subr.bf16.mxu0 0
        %910 = vmatpush2.bf16.msra.mxu0 0
        %911 = vmatprep.subr.bf16.mxu0 0
        %912 = vmatpush2.bf16.msra.mxu0 0
        %913 = vmatprep.subr.bf16.mxu0 0
        %914 = vmatpush2.bf16.msra.mxu0 0
        %915 = vmatprep.subr.bf16.mxu0 0
        %916 = vmatpush2.bf16.msra.mxu0 0
        %917 = vmatprep.subr.bf16.mxu0 0
        %918 = vmatpush2.bf16.msra.mxu0 0
        %919 = vmatprep.subr.bf16.mxu0 0
        %920 = vmatpush2.bf16.msra.mxu0 0
        %921 = vmatprep.subr.bf16.mxu0 0
        %922 = vmatpush2.bf16.msra.mxu0 0
        %923 = vmatprep.mubr.bf16.mxu0 0
        %924 = vmatmul.mubr.bf16.gmra.mxu0 %v817
        %v925 = vpop.f32.mrf.mxu0
        %v926 = vadd.f32 %v841, %v925
        %v927 = vpop.f32.mrf.mxu0
        %v928 = vpop.f32.mrf.mxu0
        %v929 = vadd.f32 %v841, %v928
        %v930 = vpop.f32.mrf.mxu0
        %931 = vdwg.mxu0
        %v932 = vmax.f32 %v926, 0.0
        %v933 = vmax.f32 %v929, 0.0
        %v934 = vpack.c.bf16 %v933, %v932
        %s935 = scalar_lea.vmem %s7, 64
        %v936 = vld [vmem:[%s935] sm:$0xf]
        %v937 = vld [vmem:[%s935 + $0x4] sm:$0xf]
        %v938 = vld [vmem:[%s935 + $0x8] sm:$0xf]
        %v939 = vld [vmem:[%s935 + $0xc] sm:$0xf]
        %v940 = vld [vmem:[%s935 + $0x10] sm:$0xf]
        %v941 = vld [vmem:[%s935 + $0x14] sm:$0xf]
        %v942 = vld [vmem:[%s935 + $0x18] sm:$0xf]
        %v943 = vld [vmem:[%s935 + $0x1c] sm:$0xf]
        %v944 = vld [vmem:[%s935 + $0x20] sm:$0xf]
        %v945 = vld [vmem:[%s935 + $0x24] sm:$0xf]
        %v946 = vld [vmem:[%s935 + $0x28] sm:$0xf]
        %v947 = vld [vmem:[%s935 + $0x2c] sm:$0xf]
        %v948 = vld [vmem:[%s935 + $0x30] sm:$0xf]
        %v949 = vld [vmem:[%s935 + $0x34] sm:$0xf]
        %v950 = vld [vmem:[%s935 + $0x38] sm:$0xf]
        %v951 = vld [vmem:[%s935 + $0x3c] sm:$0xf]
        %s952 = scalar_lea.vmem %s8, 1
        %v953 = vld [vmem:[%s952] sm:$0x1]
        %v955 = vlaneseq
        %v956 = vshrl.u32 %v955, 7
        %v957 = vsub.s32 0, %v956
        %v958 = vrot.slane %v953, %v957
        %v976 = vunpack.c.l.b16 %v936
        %v977 = vunpack.c.l.b16 %v937
        %v978 = vunpack.c.l.b16 %v938
        %v979 = vunpack.c.l.b16 %v939
        %v980 = vunpack.c.l.b16 %v940
        %v981 = vunpack.c.l.b16 %v941
        %v982 = vunpack.c.l.b16 %v942
        %v983 = vunpack.c.l.b16 %v943
        %v984 = vunpack.c.l.b16 %v944
        %v985 = vunpack.c.l.b16 %v945
        %v986 = vunpack.c.l.b16 %v946
        %v987 = vunpack.c.l.b16 %v947
        %v988 = vunpack.c.l.b16 %v948
        %v989 = vunpack.c.l.b16 %v949
        %v990 = vunpack.c.l.b16 %v950
        %v991 = vunpack.c.l.b16 %v951
        %v992 = vpack.c.b16 %v977, %v976
        %v993 = vpack.c.b16 %v979, %v978
        %v994 = vpack.c.b16 %v981, %v980
        %v995 = vpack.c.b16 %v983, %v982
        %v996 = vpack.c.b16 %v985, %v984
        %v997 = vpack.c.b16 %v987, %v986
        %v998 = vpack.c.b16 %v989, %v988
        %v999 = vpack.c.b16 %v991, %v990
        %1008 = vmatprep.subr.bf16.mxu0 0
        %1009 = vmatpush1.bf16.msra.mxu0 %v999
        %1010 = vmatprep.subr.bf16.mxu0 0
        %1011 = vmatpush1.bf16.msra.mxu0 %v998
        %1012 = vmatprep.subr.bf16.mxu0 0
        %1013 = vmatpush1.bf16.msra.mxu0 %v997
        %1014 = vmatprep.subr.bf16.mxu0 0
        %1015 = vmatpush1.bf16.msra.mxu0 %v996
        %1016 = vmatprep.subr.bf16.mxu0 0
        %1017 = vmatpush1.bf16.msra.mxu0 %v995
        %1018 = vmatprep.subr.bf16.mxu0 0
        %1019 = vmatpush1.bf16.msra.mxu0 %v994
        %1020 = vmatprep.subr.bf16.mxu0 0
        %1021 = vmatpush1.bf16.msra.mxu0 %v993
        %1022 = vmatprep.subr.bf16.mxu0 0
        %1023 = vmatpush1.bf16.msra.mxu0 %v992
        %1024 = vmatprep.subr.bf16.mxu0 0
        %1025 = vmatpush2.bf16.msra.mxu0 0
        %1026 = vmatprep.subr.bf16.mxu0 0
        %1027 = vmatpush2.bf16.msra.mxu0 0
        %1028 = vmatprep.subr.bf16.mxu0 0
        %1029 = vmatpush2.bf16.msra.mxu0 0
        %1030 = vmatprep.subr.bf16.mxu0 0
        %1031 = vmatpush2.bf16.msra.mxu0 0
        %1032 = vmatprep.subr.bf16.mxu0 0
        %1033 = vmatpush2.bf16.msra.mxu0 0
        %1034 = vmatprep.subr.bf16.mxu0 0
        %1035 = vmatpush2.bf16.msra.mxu0 0
        %1036 = vmatprep.subr.bf16.mxu0 0
        %1037 = vmatpush2.bf16.msra.mxu0 0
        %1038 = vmatprep.subr.bf16.mxu0 0
        %1039 = vmatpush2.bf16.msra.mxu0 0
        %1040 = vmatprep.mubr.bf16.mxu0 0
        %1041 = vmatmul.mubr.bf16.gmra.mxu0 %v934
        %v1042 = vpop.f32.mrf.mxu0
        %v1043 = vadd.f32 %v958, %v1042
        %v1044 = vpop.f32.mrf.mxu0
        %v1045 = vpop.f32.mrf.mxu0
        %v1046 = vadd.f32 %v958, %v1045
        %v1047 = vpop.f32.mrf.mxu0
        %1048 = vdwg.mxu0
        %v1049 = vpack.c.bf16 %v814, %v811
        %v1050 = vpack.c.bf16 %v1046, %v1043
        %v1051 = vld [vmem:[%s2] sm:$0xf]
        %v1052 = vld [vmem:[%s2 + $0x4] sm:$0xf]
        %v1055 = vunpack.c.l.b16 %v1051
        %v1056 = vunpack.c.l.b16 %v1052
        %v1057 = vpack.c.b16 %v1056, %v1055
        %vm1058 = vcmask 130048
        %v1060 = vsel %vm1058, %v1057, 0
        %1062 = vmatprep.subr.bf16.mxu0 0
        %1063 = vmatpush1.bf16.msra.mxu0 0
        %1064 = vmatprep.subr.bf16.mxu0 0
        %1065 = vmatpush1.bf16.msra.mxu0 0
        %1066 = vmatprep.subr.bf16.mxu0 0
        %1067 = vmatpush1.bf16.msra.mxu0 0
        %1068 = vmatprep.subr.bf16.mxu0 0
        %1069 = vmatpush1.bf16.msra.mxu0 0
        %1070 = vmatprep.subr.bf16.mxu0 0
        %1071 = vmatpush1.bf16.msra.mxu0 0
        %1072 = vmatprep.subr.bf16.mxu0 0
        %1073 = vmatpush1.bf16.msra.mxu0 0
        %1074 = vmatprep.subr.bf16.mxu0 0
        %1075 = vmatpush1.bf16.msra.mxu0 0
        %1076 = vmatprep.subr.bf16.mxu0 %v1050
        %1077 = vmatpush1.bf16.msra.mxu0 %v1049
        %1078 = vmatprep.subr.bf16.mxu0 0
        %1079 = vmatpush2.bf16.msra.mxu0 0
        %1080 = vmatprep.subr.bf16.mxu0 0
        %1081 = vmatpush2.bf16.msra.mxu0 0
        %1082 = vmatprep.subr.bf16.mxu0 0
        %1083 = vmatpush2.bf16.msra.mxu0 0
        %1084 = vmatprep.subr.bf16.mxu0 0
        %1085 = vmatpush2.bf16.msra.mxu0 0
        %1086 = vmatprep.subr.bf16.mxu0 0
        %1087 = vmatpush2.bf16.msra.mxu0 0
        %1088 = vmatprep.subr.bf16.mxu0 0
        %1089 = vmatpush2.bf16.msra.mxu0 0
        %1090 = vmatprep.subr.bf16.mxu0 0
        %1091 = vmatpush2.bf16.msra.mxu0 0
        %1092 = vmatprep.subr.bf16.mxu0 0
        %1093 = vmatpush2.bf16.msra.mxu0 0
        %1094 = vmatprep.mubr.bf16.mxu0 0
        %1095 = vmatmul.mubr.bf16.gmra.mxu0 %v1060
        %v1096 = vpop.f32.mrf.mxu0
        %v1097 = vadd.f32 0.0, %v1096
        %v1098 = vpop.f32.mrf.mxu0
        %v1099 = vadd.f32 0.0, %v1098
        %v1100 = vpop.f32.mrf.mxu0
        %v1101 = vadd.f32 0.0, %v1100
        %v1102 = vpop.f32.mrf.mxu0
        %v1103 = vadd.f32 0.0, %v1102
        %1104 = vdwg.mxu0
        %v1105 = vld [vmem:[%s11] sm:$0xff]
        %v1106 = vld [vmem:[%s11 + $0x8] sm:$0xff]
        %v1107 = vld [vmem:[%s11 + $0x10] sm:$0xff]
        %v1108 = vld [vmem:[%s11 + $0x18] sm:$0xff]
        %v1109 = vld [vmem:[%s11 + $0x20] sm:$0xff]
        %v1110 = vld [vmem:[%s11 + $0x28] sm:$0xff]
        %v1111 = vld [vmem:[%s11 + $0x30] sm:$0xff]
        %v1112 = vld [vmem:[%s11 + $0x38] sm:$0xff]
        %v1113 = vld [vmem:[%s11 + $0x40] sm:$0xff]
        %v1114 = vld [vmem:[%s11 + $0x48] sm:$0xff]
        %v1115 = vld [vmem:[%s11 + $0x50] sm:$0xff]
        %v1116 = vld [vmem:[%s11 + $0x58] sm:$0xff]
        %v1117 = vld [vmem:[%s11 + $0x60] sm:$0xff]
        %v1118 = vld [vmem:[%s11 + $0x68] sm:$0xff]
        %v1119 = vld [vmem:[%s11 + $0x70] sm:$0xff]
        %v1120 = vld [vmem:[%s11 + $0x78] sm:$0xff]
        %v1121 = vld [vmem:[%s11 + $0x80] sm:$0xff]
        %v1122 = vld [vmem:[%s11 + $0x88] sm:$0xff]
        %v1123 = vld [vmem:[%s11 + $0x90] sm:$0xff]
        %v1124 = vld [vmem:[%s11 + $0x98] sm:$0xff]
        %v1125 = vld [vmem:[%s11 + $0xa0] sm:$0xff]
        %v1126 = vld [vmem:[%s11 + $0xa8] sm:$0xff]
        %v1127 = vld [vmem:[%s11 + $0xb0] sm:$0xff]
        %v1128 = vld [vmem:[%s11 + $0xb8] sm:$0xff]
        %v1129 = vld [vmem:[%s11 + $0xc0] sm:$0xff]
        %v1130 = vld [vmem:[%s11 + $0xc8] sm:$0xff]
        %v1131 = vld [vmem:[%s11 + $0xd0] sm:$0xff]
        %v1132 = vld [vmem:[%s11 + $0xd8] sm:$0xff]
        %v1133 = vld [vmem:[%s11 + $0xe0] sm:$0xff]
        %v1134 = vld [vmem:[%s11 + $0xe8] sm:$0xff]
        %v1135 = vld [vmem:[%s11 + $0xf0] sm:$0xff]
        %v1136 = vld [vmem:[%s11 + $0xf8] sm:$0xff]
        %v1137 = vld [vmem:[%s11 + $0x100] sm:$0xff]
        %v1138 = vld [vmem:[%s11 + $0x108] sm:$0xff]
        %v1139 = vld [vmem:[%s11 + $0x110] sm:$0xff]
        %v1140 = vld [vmem:[%s11 + $0x118] sm:$0xff]
        %v1141 = vld [vmem:[%s11 + $0x120] sm:$0xff]
        %v1142 = vld [vmem:[%s11 + $0x128] sm:$0xff]
        %v1143 = vld [vmem:[%s11 + $0x130] sm:$0xff]
        %v1144 = vld [vmem:[%s11 + $0x138] sm:$0xff]
        %v1145 = vld [vmem:[%s11 + $0x140] sm:$0xff]
        %v1146 = vld [vmem:[%s11 + $0x148] sm:$0xff]
        %v1147 = vld [vmem:[%s11 + $0x150] sm:$0xff]
        %v1148 = vld [vmem:[%s11 + $0x158] sm:$0xff]
        %v1149 = vld [vmem:[%s11 + $0x160] sm:$0xff]
        %v1150 = vld [vmem:[%s11 + $0x168] sm:$0xff]
        %v1151 = vld [vmem:[%s11 + $0x170] sm:$0xff]
        %v1152 = vld [vmem:[%s11 + $0x178] sm:$0xff]
        %v1153 = vld [vmem:[%s12] sm:$0x3f]
        %v1155 = vlaneseq
        %v1156 = vshrl.u32 %v1155, 7
        %v1157 = vsub.s32 0, %v1156
        %v1158 = vrot.slane %v1153, %v1157
        %v1159 = vlaneseq
        %v1160 = vshrl.u32 %v1159, 7
        %v1161 = vsub.s32 1, %v1160
        %v1162 = vrot.slane %v1153, %v1161
        %v1163 = vlaneseq
        %v1164 = vshrl.u32 %v1163, 7
        %v1165 = vsub.s32 2, %v1164
        %v1166 = vrot.slane %v1153, %v1165
        %v1167 = vlaneseq
        %v1168 = vshrl.u32 %v1167, 7
        %v1169 = vsub.s32 3, %v1168
        %v1170 = vrot.slane %v1153, %v1169
        %v1171 = vlaneseq
        %v1172 = vshrl.u32 %v1171, 7
        %v1173 = vsub.s32 4, %v1172
        %v1174 = vrot.slane %v1153, %v1173
        %v1175 = vlaneseq
        %v1176 = vshrl.u32 %v1175, 7
        %v1177 = vsub.s32 5, %v1176
        %v1178 = vrot.slane %v1153, %v1177
        %v1233 = vunpack.c.l.b16 %v1105
        %v1234 = vunpack.c.h.b16 %v1105
        %v1235 = vunpack.c.l.b16 %v1106
        %v1236 = vunpack.c.h.b16 %v1106
        %v1237 = vunpack.c.l.b16 %v1107
        %v1238 = vunpack.c.h.b16 %v1107
        %v1239 = vunpack.c.l.b16 %v1108
        %v1240 = vunpack.c.h.b16 %v1108
        %v1241 = vunpack.c.l.b16 %v1109
        %v1242 = vunpack.c.h.b16 %v1109
        %v1243 = vunpack.c.l.b16 %v1110
        %v1244 = vunpack.c.h.b16 %v1110
        %v1245 = vunpack.c.l.b16 %v1111
        %v1246 = vunpack.c.h.b16 %v1111
        %v1247 = vunpack.c.l.b16 %v1112
        %v1248 = vunpack.c.h.b16 %v1112
        %v1249 = vunpack.c.l.b16 %v1113
        %v1250 = vunpack.c.h.b16 %v1113
        %v1251 = vunpack.c.l.b16 %v1114
        %v1252 = vunpack.c.h.b16 %v1114
        %v1253 = vunpack.c.l.b16 %v1115
        %v1254 = vunpack.c.h.b16 %v1115
        %v1255 = vunpack.c.l.b16 %v1116
        %v1256 = vunpack.c.h.b16 %v1116
        %v1257 = vunpack.c.l.b16 %v1117
        %v1258 = vunpack.c.h.b16 %v1117
        %v1259 = vunpack.c.l.b16 %v1118
        %v1260 = vunpack.c.h.b16 %v1118
        %v1261 = vunpack.c.l.b16 %v1119
        %v1262 = vunpack.c.h.b16 %v1119
        %v1263 = vunpack.c.l.b16 %v1120
        %v1264 = vunpack.c.h.b16 %v1120
        %v1265 = vunpack.c.l.b16 %v1121
        %v1266 = vunpack.c.h.b16 %v1121
        %v1267 = vunpack.c.l.b16 %v1122
        %v1268 = vunpack.c.h.b16 %v1122
        %v1269 = vunpack.c.l.b16 %v1123
        %v1270 = vunpack.c.h.b16 %v1123
        %v1271 = vunpack.c.l.b16 %v1124
        %v1272 = vunpack.c.h.b16 %v1124
        %v1273 = vunpack.c.l.b16 %v1125
        %v1274 = vunpack.c.h.b16 %v1125
        %v1275 = vunpack.c.l.b16 %v1126
        %v1276 = vunpack.c.h.b16 %v1126
        %v1277 = vunpack.c.l.b16 %v1127
        %v1278 = vunpack.c.h.b16 %v1127
        %v1279 = vunpack.c.l.b16 %v1128
        %v1280 = vunpack.c.h.b16 %v1128
        %v1281 = vunpack.c.l.b16 %v1129
        %v1282 = vunpack.c.h.b16 %v1129
        %v1283 = vunpack.c.l.b16 %v1130
        %v1284 = vunpack.c.h.b16 %v1130
        %v1285 = vunpack.c.l.b16 %v1131
        %v1286 = vunpack.c.h.b16 %v1131
        %v1287 = vunpack.c.l.b16 %v1132
        %v1288 = vunpack.c.h.b16 %v1132
        %v1289 = vunpack.c.l.b16 %v1133
        %v1290 = vunpack.c.h.b16 %v1133
        %v1291 = vunpack.c.l.b16 %v1134
        %v1292 = vunpack.c.h.b16 %v1134
        %v1293 = vunpack.c.l.b16 %v1135
        %v1294 = vunpack.c.h.b16 %v1135
        %v1295 = vunpack.c.l.b16 %v1136
        %v1296 = vunpack.c.h.b16 %v1136
        %v1297 = vunpack.c.l.b16 %v1137
        %v1298 = vunpack.c.h.b16 %v1137
        %v1299 = vunpack.c.l.b16 %v1138
        %v1300 = vunpack.c.h.b16 %v1138
        %v1301 = vunpack.c.l.b16 %v1139
        %v1302 = vunpack.c.h.b16 %v1139
        %v1303 = vunpack.c.l.b16 %v1140
        %v1304 = vunpack.c.h.b16 %v1140
        %v1305 = vunpack.c.l.b16 %v1141
        %v1306 = vunpack.c.h.b16 %v1141
        %v1307 = vunpack.c.l.b16 %v1142
        %v1308 = vunpack.c.h.b16 %v1142
        %v1309 = vunpack.c.l.b16 %v1143
        %v1310 = vunpack.c.h.b16 %v1143
        %v1311 = vunpack.c.l.b16 %v1144
        %v1312 = vunpack.c.h.b16 %v1144
        %v1313 = vunpack.c.l.b16 %v1145
        %v1314 = vunpack.c.h.b16 %v1145
        %v1315 = vunpack.c.l.b16 %v1146
        %v1316 = vunpack.c.h.b16 %v1146
        %v1317 = vunpack.c.l.b16 %v1147
        %v1318 = vunpack.c.h.b16 %v1147
        %v1319 = vunpack.c.l.b16 %v1148
        %v1320 = vunpack.c.h.b16 %v1148
        %v1321 = vunpack.c.l.b16 %v1149
        %v1322 = vunpack.c.h.b16 %v1149
        %v1323 = vunpack.c.l.b16 %v1150
        %v1324 = vunpack.c.h.b16 %v1150
        %v1325 = vunpack.c.l.b16 %v1151
        %v1326 = vunpack.c.h.b16 %v1151
        %v1327 = vunpack.c.l.b16 %v1152
        %v1328 = vunpack.c.h.b16 %v1152
        %v1329 = vpack.c.b16 %v1239, %v1233
        %v1330 = vpack.c.b16 %v1240, %v1234
        %v1331 = vpack.c.b16 %v1241, %v1235
        %v1332 = vpack.c.b16 %v1242, %v1236
        %v1333 = vpack.c.b16 %v1243, %v1237
        %v1334 = vpack.c.b16 %v1244, %v1238
        %v1335 = vpack.c.b16 %v1251, %v1245
        %v1336 = vpack.c.b16 %v1252, %v1246
        %v1337 = vpack.c.b16 %v1253, %v1247
        %v1338 = vpack.c.b16 %v1254, %v1248
        %v1339 = vpack.c.b16 %v1255, %v1249
        %v1340 = vpack.c.b16 %v1256, %v1250
        %v1341 = vpack.c.b16 %v1263, %v1257
        %v1342 = vpack.c.b16 %v1264, %v1258
        %v1343 = vpack.c.b16 %v1265, %v1259
        %v1344 = vpack.c.b16 %v1266, %v1260
        %v1345 = vpack.c.b16 %v1267, %v1261
        %v1346 = vpack.c.b16 %v1268, %v1262
        %v1347 = vpack.c.b16 %v1275, %v1269
        %v1348 = vpack.c.b16 %v1276, %v1270
        %v1349 = vpack.c.b16 %v1277, %v1271
        %v1350 = vpack.c.b16 %v1278, %v1272
        %v1351 = vpack.c.b16 %v1279, %v1273
        %v1352 = vpack.c.b16 %v1280, %v1274
        %v1353 = vpack.c.b16 %v1287, %v1281
        %v1354 = vpack.c.b16 %v1288, %v1282
        %v1355 = vpack.c.b16 %v1289, %v1283
        %v1356 = vpack.c.b16 %v1290, %v1284
        %v1357 = vpack.c.b16 %v1291, %v1285
        %v1358 = vpack.c.b16 %v1292, %v1286
        %v1359 = vpack.c.b16 %v1299, %v1293
        %v1360 = vpack.c.b16 %v1300, %v1294
        %v1361 = vpack.c.b16 %v1301, %v1295
        %v1362 = vpack.c.b16 %v1302, %v1296
        %v1363 = vpack.c.b16 %v1303, %v1297
        %v1364 = vpack.c.b16 %v1304, %v1298
        %v1365 = vpack.c.b16 %v1311, %v1305
        %v1366 = vpack.c.b16 %v1312, %v1306
        %v1367 = vpack.c.b16 %v1313, %v1307
        %v1368 = vpack.c.b16 %v1314, %v1308
        %v1369 = vpack.c.b16 %v1315, %v1309
        %v1370 = vpack.c.b16 %v1316, %v1310
        %v1371 = vpack.c.b16 %v1323, %v1317
        %v1372 = vpack.c.b16 %v1324, %v1318
        %v1373 = vpack.c.b16 %v1325, %v1319
        %v1374 = vpack.c.b16 %v1326, %v1320
        %v1375 = vpack.c.b16 %v1327, %v1321
        %v1376 = vpack.c.b16 %v1328, %v1322
        %1425 = vmatprep.subr.bf16.mxu0 %v1372
        %1426 = vmatpush1.bf16.msra.mxu0 %v1371
        %1427 = vmatprep.subr.bf16.mxu0 %v1366
        %1428 = vmatpush1.bf16.msra.mxu0 %v1365
        %1429 = vmatprep.subr.bf16.mxu0 %v1360
        %1430 = vmatpush1.bf16.msra.mxu0 %v1359
        %1431 = vmatprep.subr.bf16.mxu0 %v1354
        %1432 = vmatpush1.bf16.msra.mxu0 %v1353
        %1433 = vmatprep.subr.bf16.mxu0 %v1348
        %1434 = vmatpush1.bf16.msra.mxu0 %v1347
        %1435 = vmatprep.subr.bf16.mxu0 %v1342
        %1436 = vmatpush1.bf16.msra.mxu0 %v1341
        %1437 = vmatprep.subr.bf16.mxu0 %v1336
        %1438 = vmatpush1.bf16.msra.mxu0 %v1335
        %1439 = vmatprep.subr.bf16.mxu0 %v1330
        %1440 = vmatpush1.bf16.msra.mxu0 %v1329
        %1441 = vmatprep.subr.bf16.mxu0 0
        %1442 = vmatpush2.bf16.msra.mxu0 0
        %1443 = vmatprep.subr.bf16.mxu0 0
        %1444 = vmatpush2.bf16.msra.mxu0 0
        %1445 = vmatprep.subr.bf16.mxu0 0
        %1446 = vmatpush2.bf16.msra.mxu0 0
        %1447 = vmatprep.subr.bf16.mxu0 0
        %1448 = vmatpush2.bf16.msra.mxu0 0
        %1449 = vmatprep.subr.bf16.mxu0 0
        %1450 = vmatpush2.bf16.msra.mxu0 0
        %1451 = vmatprep.subr.bf16.mxu0 0
        %1452 = vmatpush2.bf16.msra.mxu0 0
        %1453 = vmatprep.subr.bf16.mxu0 0
        %1454 = vmatpush2.bf16.msra.mxu0 0
        %1455 = vmatprep.subr.bf16.mxu0 0
        %1456 = vmatpush2.bf16.msra.mxu0 0
        %1457 = vmatprep.mubr.bf16.mxu0 0
        %1458 = vmatmul.mubr.bf16.gmra.mxu0 %v431
        %v1459 = vpop.f32.mrf.mxu0
        %v1460 = vadd.f32 %v1158, %v1459
        %v1461 = vpop.f32.mrf.mxu0
        %v1462 = vadd.f32 %v1162, %v1461
        %v1463 = vpop.f32.mrf.mxu0
        %v1464 = vadd.f32 %v1158, %v1463
        %v1465 = vpop.f32.mrf.mxu0
        %v1466 = vadd.f32 %v1162, %v1465
        %1467 = vdwg.mxu0
        %1468 = vmatprep.subr.bf16.mxu0 %v1374
        %1469 = vmatpush1.bf16.msra.mxu0 %v1373
        %1470 = vmatprep.subr.bf16.mxu0 %v1368
        %1471 = vmatpush1.bf16.msra.mxu0 %v1367
        %1472 = vmatprep.subr.bf16.mxu0 %v1362
        %1473 = vmatpush1.bf16.msra.mxu0 %v1361
        %1474 = vmatprep.subr.bf16.mxu0 %v1356
        %1475 = vmatpush1.bf16.msra.mxu0 %v1355
        %1476 = vmatprep.subr.bf16.mxu0 %v1350
        %1477 = vmatpush1.bf16.msra.mxu0 %v1349
        %1478 = vmatprep.subr.bf16.mxu0 %v1344
        %1479 = vmatpush1.bf16.msra.mxu0 %v1343
        %1480 = vmatprep.subr.bf16.mxu0 %v1338
        %1481 = vmatpush1.bf16.msra.mxu0 %v1337
        %1482 = vmatprep.subr.bf16.mxu0 %v1332
        %1483 = vmatpush1.bf16.msra.mxu0 %v1331
        %1484 = vmatprep.subr.bf16.mxu0 0
        %1485 = vmatpush2.bf16.msra.mxu0 0
        %1486 = vmatprep.subr.bf16.mxu0 0
        %1487 = vmatpush2.bf16.msra.mxu0 0
        %1488 = vmatprep.subr.bf16.mxu0 0
        %1489 = vmatpush2.bf16.msra.mxu0 0
        %1490 = vmatprep.subr.bf16.mxu0 0
        %1491 = vmatpush2.bf16.msra.mxu0 0
        %1492 = vmatprep.subr.bf16.mxu0 0
        %1493 = vmatpush2.bf16.msra.mxu0 0
        %1494 = vmatprep.subr.bf16.mxu0 0
        %1495 = vmatpush2.bf16.msra.mxu0 0
        %1496 = vmatprep.subr.bf16.mxu0 0
        %1497 = vmatpush2.bf16.msra.mxu0 0
        %1498 = vmatprep.subr.bf16.mxu0 0
        %1499 = vmatpush2.bf16.msra.mxu0 0
        %1500 = vmatprep.mubr.bf16.mxu0 0
        %1501 = vmatmul.mubr.bf16.gmra.mxu0 %v431
        %v1502 = vpop.f32.mrf.mxu0
        %v1503 = vadd.f32 %v1166, %v1502
        %v1504 = vpop.f32.mrf.mxu0
        %v1505 = vadd.f32 %v1170, %v1504
        %v1506 = vpop.f32.mrf.mxu0
        %v1507 = vadd.f32 %v1166, %v1506
        %v1508 = vpop.f32.mrf.mxu0
        %v1509 = vadd.f32 %v1170, %v1508
        %1510 = vdwg.mxu0
        %1511 = vmatprep.subr.bf16.mxu0 %v1376
        %1512 = vmatpush1.bf16.msra.mxu0 %v1375
        %1513 = vmatprep.subr.bf16.mxu0 %v1370
        %1514 = vmatpush1.bf16.msra.mxu0 %v1369
        %1515 = vmatprep.subr.bf16.mxu0 %v1364
        %1516 = vmatpush1.bf16.msra.mxu0 %v1363
        %1517 = vmatprep.subr.bf16.mxu0 %v1358
        %1518 = vmatpush1.bf16.msra.mxu0 %v1357
        %1519 = vmatprep.subr.bf16.mxu0 %v1352
        %1520 = vmatpush1.bf16.msra.mxu0 %v1351
        %1521 = vmatprep.subr.bf16.mxu0 %v1346
        %1522 = vmatpush1.bf16.msra.mxu0 %v1345
        %1523 = vmatprep.subr.bf16.mxu0 %v1340
        %1524 = vmatpush1.bf16.msra.mxu0 %v1339
        %1525 = vmatprep.subr.bf16.mxu0 %v1334
        %1526 = vmatpush1.bf16.msra.mxu0 %v1333
        %1527 = vmatprep.subr.bf16.mxu0 0
        %1528 = vmatpush2.bf16.msra.mxu0 0
        %1529 = vmatprep.subr.bf16.mxu0 0
        %1530 = vmatpush2.bf16.msra.mxu0 0
        %1531 = vmatprep.subr.bf16.mxu0 0
        %1532 = vmatpush2.bf16.msra.mxu0 0
        %1533 = vmatprep.subr.bf16.mxu0 0
        %1534 = vmatpush2.bf16.msra.mxu0 0
        %1535 = vmatprep.subr.bf16.mxu0 0
        %1536 = vmatpush2.bf16.msra.mxu0 0
        %1537 = vmatprep.subr.bf16.mxu0 0
        %1538 = vmatpush2.bf16.msra.mxu0 0
        %1539 = vmatprep.subr.bf16.mxu0 0
        %1540 = vmatpush2.bf16.msra.mxu0 0
        %1541 = vmatprep.subr.bf16.mxu0 0
        %1542 = vmatpush2.bf16.msra.mxu0 0
        %1543 = vmatprep.mubr.bf16.mxu0 0
        %1544 = vmatmul.mubr.bf16.gmra.mxu0 %v431
        %v1545 = vpop.f32.mrf.mxu0
        %v1546 = vadd.f32 %v1174, %v1545
        %v1547 = vpop.f32.mrf.mxu0
        %v1548 = vadd.f32 %v1178, %v1547
        %v1549 = vpop.f32.mrf.mxu0
        %v1550 = vadd.f32 %v1174, %v1549
        %v1551 = vpop.f32.mrf.mxu0
        %v1552 = vadd.f32 %v1178, %v1551
        %1553 = vdwg.mxu0
        %v1554 = vpack.c.bf16 %v1101, %v1097
        %v1555 = vld [vmem:[%s9] sm:$0xff]
        %v1556 = vld [vmem:[%s9 + $0x8] sm:$0xf]
        %v1557 = vld [vmem:[%s9 + $0xc] sm:$0xff]
        %v1558 = vld [vmem:[%s9 + $0x14] sm:$0xf]
        %v1559 = vld [vmem:[%s9 + $0x18] sm:$0xff]
        %v1560 = vld [vmem:[%s9 + $0x20] sm:$0xf]
        %v1561 = vld [vmem:[%s9 + $0x24] sm:$0xff]
        %v1562 = vld [vmem:[%s9 + $0x2c] sm:$0xf]
        %v1563 = vld [vmem:[%s9 + $0x30] sm:$0xff]
        %v1564 = vld [vmem:[%s9 + $0x38] sm:$0xf]
        %v1565 = vld [vmem:[%s9 + $0x3c] sm:$0xff]
        %v1566 = vld [vmem:[%s9 + $0x44] sm:$0xf]
        %v1567 = vld [vmem:[%s9 + $0x48] sm:$0xff]
        %v1568 = vld [vmem:[%s9 + $0x50] sm:$0xf]
        %v1569 = vld [vmem:[%s9 + $0x54] sm:$0xff]
        %v1570 = vld [vmem:[%s9 + $0x5c] sm:$0xf]
        %v1571 = vld [vmem:[%s9 + $0x60] sm:$0xff]
        %v1572 = vld [vmem:[%s9 + $0x68] sm:$0xf]
        %v1573 = vld [vmem:[%s9 + $0x6c] sm:$0xff]
        %v1574 = vld [vmem:[%s9 + $0x74] sm:$0xf]
        %v1575 = vld [vmem:[%s9 + $0x78] sm:$0xff]
        %v1576 = vld [vmem:[%s9 + $0x80] sm:$0xf]
        %v1577 = vld [vmem:[%s9 + $0x84] sm:$0xff]
        %v1578 = vld [vmem:[%s9 + $0x8c] sm:$0xf]
        %v1579 = vld [vmem:[%s9 + $0x90] sm:$0xff]
        %v1580 = vld [vmem:[%s9 + $0x98] sm:$0xf]
        %v1581 = vld [vmem:[%s9 + $0x9c] sm:$0xff]
        %v1582 = vld [vmem:[%s9 + $0xa4] sm:$0xf]
        %v1583 = vld [vmem:[%s9 + $0xa8] sm:$0xff]
        %v1584 = vld [vmem:[%s9 + $0xb0] sm:$0xf]
        %v1585 = vld [vmem:[%s9 + $0xb4] sm:$0xff]
        %v1586 = vld [vmem:[%s9 + $0xbc] sm:$0xf]
        %v1587 = vld [vmem:[%s10] sm:$0x7]
        %v1589 = vlaneseq
        %v1590 = vshrl.u32 %v1589, 7
        %v1591 = vsub.s32 0, %v1590
        %v1592 = vrot.slane %v1587, %v1591
        %v1593 = vlaneseq
        %v1594 = vshrl.u32 %v1593, 7
        %v1595 = vsub.s32 1, %v1594
        %v1596 = vrot.slane %v1587, %v1595
        %v1597 = vlaneseq
        %v1598 = vshrl.u32 %v1597, 7
        %v1599 = vsub.s32 2, %v1598
        %v1600 = vrot.slane %v1587, %v1599
        %v1636 = vunpack.c.l.b16 %v1555
        %v1637 = vunpack.c.h.b16 %v1555
        %v1638 = vunpack.c.l.b16 %v1556
        %v1639 = vunpack.c.l.b16 %v1557
        %v1640 = vunpack.c.h.b16 %v1557
        %v1641 = vunpack.c.l.b16 %v1558
        %v1642 = vunpack.c.l.b16 %v1559
        %v1643 = vunpack.c.h.b16 %v1559
        %v1644 = vunpack.c.l.b16 %v1560
        %v1645 = vunpack.c.l.b16 %v1561
        %v1646 = vunpack.c.h.b16 %v1561
        %v1647 = vunpack.c.l.b16 %v1562
        %v1648 = vunpack.c.l.b16 %v1563
        %v1649 = vunpack.c.h.b16 %v1563
        %v1650 = vunpack.c.l.b16 %v1564
        %v1651 = vunpack.c.l.b16 %v1565
        %v1652 = vunpack.c.h.b16 %v1565
        %v1653 = vunpack.c.l.b16 %v1566
        %v1654 = vunpack.c.l.b16 %v1567
        %v1655 = vunpack.c.h.b16 %v1567
        %v1656 = vunpack.c.l.b16 %v1568
        %v1657 = vunpack.c.l.b16 %v1569
        %v1658 = vunpack.c.h.b16 %v1569
        %v1659 = vunpack.c.l.b16 %v1570
        %v1660 = vunpack.c.l.b16 %v1571
        %v1661 = vunpack.c.h.b16 %v1571
        %v1662 = vunpack.c.l.b16 %v1572
        %v1663 = vunpack.c.l.b16 %v1573
        %v1664 = vunpack.c.h.b16 %v1573
        %v1665 = vunpack.c.l.b16 %v1574
        %v1666 = vunpack.c.l.b16 %v1575
        %v1667 = vunpack.c.h.b16 %v1575
        %v1668 = vunpack.c.l.b16 %v1576
        %v1669 = vunpack.c.l.b16 %v1577
        %v1670 = vunpack.c.h.b16 %v1577
        %v1671 = vunpack.c.l.b16 %v1578
        %v1672 = vunpack.c.l.b16 %v1579
        %v1673 = vunpack.c.h.b16 %v1579
        %v1674 = vunpack.c.l.b16 %v1580
        %v1675 = vunpack.c.l.b16 %v1581
        %v1676 = vunpack.c.h.b16 %v1581
        %v1677 = vunpack.c.l.b16 %v1582
        %v1678 = vunpack.c.l.b16 %v1583
        %v1679 = vunpack.c.h.b16 %v1583
        %v1680 = vunpack.c.l.b16 %v1584
        %v1681 = vunpack.c.l.b16 %v1585
        %v1682 = vunpack.c.h.b16 %v1585
        %v1683 = vunpack.c.l.b16 %v1586
        %v1684 = vpack.c.b16 %v1639, %v1636
        %v1685 = vpack.c.b16 %v1640, %v1637
        %v1686 = vpack.c.b16 %v1641, %v1638
        %v1687 = vpack.c.b16 %v1645, %v1642
        %v1688 = vpack.c.b16 %v1646, %v1643
        %v1689 = vpack.c.b16 %v1647, %v1644
        %v1690 = vpack.c.b16 %v1651, %v1648
        %v1691 = vpack.c.b16 %v1652, %v1649
        %v1692 = vpack.c.b16 %v1653, %v1650
        %v1693 = vpack.c.b16 %v1657, %v1654
        %v1694 = vpack.c.b16 %v1658, %v1655
        %v1695 = vpack.c.b16 %v1659, %v1656
        %v1696 = vpack.c.b16 %v1663, %v1660
        %v1697 = vpack.c.b16 %v1664, %v1661
        %v1698 = vpack.c.b16 %v1665, %v1662
        %v1699 = vpack.c.b16 %v1669, %v1666
        %v1700 = vpack.c.b16 %v1670, %v1667
        %v1701 = vpack.c.b16 %v1671, %v1668
        %v1702 = vpack.c.b16 %v1675, %v1672
        %v1703 = vpack.c.b16 %v1676, %v1673
        %v1704 = vpack.c.b16 %v1677, %v1674
        %v1705 = vpack.c.b16 %v1681, %v1678
        %v1706 = vpack.c.b16 %v1682, %v1679
        %v1707 = vpack.c.b16 %v1683, %v1680
        %1732 = vmatprep.subr.bf16.mxu0 %v1706
        %1733 = vmatpush1.bf16.msra.mxu0 %v1705
        %1734 = vmatprep.subr.bf16.mxu0 %v1703
        %1735 = vmatpush1.bf16.msra.mxu0 %v1702
        %1736 = vmatprep.subr.bf16.mxu0 %v1700
        %1737 = vmatpush1.bf16.msra.mxu0 %v1699
        %1738 = vmatprep.subr.bf16.mxu0 %v1697
        %1739 = vmatpush1.bf16.msra.mxu0 %v1696
        %1740 = vmatprep.subr.bf16.mxu0 %v1694
        %1741 = vmatpush1.bf16.msra.mxu0 %v1693
        %1742 = vmatprep.subr.bf16.mxu0 %v1691
        %1743 = vmatpush1.bf16.msra.mxu0 %v1690
        %1744 = vmatprep.subr.bf16.mxu0 %v1688
        %1745 = vmatpush1.bf16.msra.mxu0 %v1687
        %1746 = vmatprep.subr.bf16.mxu0 %v1685
        %1747 = vmatpush1.bf16.msra.mxu0 %v1684
        %1748 = vmatprep.subr.bf16.mxu0 0
        %1749 = vmatpush2.bf16.msra.mxu0 0
        %1750 = vmatprep.subr.bf16.mxu0 0
        %1751 = vmatpush2.bf16.msra.mxu0 0
        %1752 = vmatprep.subr.bf16.mxu0 0
        %1753 = vmatpush2.bf16.msra.mxu0 0
        %1754 = vmatprep.subr.bf16.mxu0 0
        %1755 = vmatpush2.bf16.msra.mxu0 0
        %1756 = vmatprep.subr.bf16.mxu0 0
        %1757 = vmatpush2.bf16.msra.mxu0 0
        %1758 = vmatprep.subr.bf16.mxu0 0
        %1759 = vmatpush2.bf16.msra.mxu0 0
        %1760 = vmatprep.subr.bf16.mxu0 0
        %1761 = vmatpush2.bf16.msra.mxu0 0
        %1762 = vmatprep.subr.bf16.mxu0 0
        %1763 = vmatpush2.bf16.msra.mxu0 0
        %1764 = vmatprep.mubr.bf16.mxu0 0
        %1765 = vmatmul.mubr.bf16.gmra.mxu0 %v1554
        %v1766 = vpop.f32.mrf.mxu0
        %v1767 = vadd.f32 %v1592, %v1766
        %v1768 = vpop.f32.mrf.mxu0
        %v1769 = vadd.f32 %v1596, %v1768
        %v1770 = vpop.f32.mrf.mxu0
        %v1771 = vadd.f32 %v1592, %v1770
        %v1772 = vpop.f32.mrf.mxu0
        %v1773 = vadd.f32 %v1596, %v1772
        %1774 = vdwg.mxu0
        %1775 = vmatprep.subr.bf16.mxu0 0
        %1776 = vmatpush1.bf16.msra.mxu0 %v1707
        %1777 = vmatprep.subr.bf16.mxu0 0
        %1778 = vmatpush1.bf16.msra.mxu0 %v1704
        %1779 = vmatprep.subr.bf16.mxu0 0
        %1780 = vmatpush1.bf16.msra.mxu0 %v1701
        %1781 = vmatprep.subr.bf16.mxu0 0
        %1782 = vmatpush1.bf16.msra.mxu0 %v1698
        %1783 = vmatprep.subr.bf16.mxu0 0
        %1784 = vmatpush1.bf16.msra.mxu0 %v1695
        %1785 = vmatprep.subr.bf16.mxu0 0
        %1786 = vmatpush1.bf16.msra.mxu0 %v1692
        %1787 = vmatprep.subr.bf16.mxu0 0
        %1788 = vmatpush1.bf16.msra.mxu0 %v1689
        %1789 = vmatprep.subr.bf16.mxu0 0
        %1790 = vmatpush1.bf16.msra.mxu0 %v1686
        %1791 = vmatprep.subr.bf16.mxu0 0
        %1792 = vmatpush2.bf16.msra.mxu0 0
        %1793 = vmatprep.subr.bf16.mxu0 0
        %1794 = vmatpush2.bf16.msra.mxu0 0
        %1795 = vmatprep.subr.bf16.mxu0 0
        %1796 = vmatpush2.bf16.msra.mxu0 0
        %1797 = vmatprep.subr.bf16.mxu0 0
        %1798 = vmatpush2.bf16.msra.mxu0 0
        %1799 = vmatprep.subr.bf16.mxu0 0
        %1800 = vmatpush2.bf16.msra.mxu0 0
        %1801 = vmatprep.subr.bf16.mxu0 0
        %1802 = vmatpush2.bf16.msra.mxu0 0
        %1803 = vmatprep.subr.bf16.mxu0 0
        %1804 = vmatpush2.bf16.msra.mxu0 0
        %1805 = vmatprep.subr.bf16.mxu0 0
        %1806 = vmatpush2.bf16.msra.mxu0 0
        %1807 = vmatprep.mubr.bf16.mxu0 0
        %1808 = vmatmul.mubr.bf16.gmra.mxu0 %v1554
        %v1809 = vpop.f32.mrf.mxu0
        %v1810 = vadd.f32 %v1600, %v1809
        %v1811 = vpop.f32.mrf.mxu0
        %v1812 = vpop.f32.mrf.mxu0
        %v1813 = vadd.f32 %v1600, %v1812
        %v1814 = vpop.f32.mrf.mxu0
        %1815 = vdwg.mxu0
        %v1816 = vadd.f32 %v1767, %v1460
        %v1817 = vadd.f32 %v1769, %v1462
        %v1818 = vadd.f32 %v1771, %v1464
        %v1819 = vadd.f32 %v1773, %v1466
        %v1820 = vxor.u32 %v1816, 2147483648
        %v1821 = vxor.u32 %v1817, 2147483648
        %v1822 = vxor.u32 %v1818, 2147483648
        %v1823 = vxor.u32 %v1819, 2147483648
        %v1824 = vmul.f32 %v1820, 1.442695
        %v1825 = vpow.pop %v1824
        %v1826 = vmul.f32 %v1821, 1.442695
        %v1827 = vpow.pop %v1826
        %v1828 = vmul.f32 %v1822, 1.442695
        %v1829 = vpow.pop %v1828
        %v1830 = vmul.f32 %v1823, 1.442695
        %v1831 = vpow.pop %v1830
        %v1832 = vadd.f32 %v1825, 1.0
        %v1833 = vadd.f32 %v1827, 1.0
        %v1834 = vadd.f32 %v1829, 1.0
        %v1835 = vadd.f32 %v1831, 1.0
        %v1836 = vrcp.pop %v1832
        %v1837 = vmul.f32 1.0, %v1836
        %v1838 = vrcp.pop %v1833
        %v1839 = vmul.f32 1.0, %v1838
        %v1840 = vrcp.pop %v1834
        %v1841 = vmul.f32 1.0, %v1840
        %v1842 = vrcp.pop %v1835
        %v1843 = vmul.f32 1.0, %v1842
        %v1844 = vmul.f32 %v1837, %v1503
        %v1845 = vmul.f32 %v1841, %v1507
        %v1846 = vadd.f32 %v1810, %v1844
        %v1847 = vadd.f32 %v1813, %v1845
        %v1848 = vtanh.pop %v1846
        %v1849 = vtanh.pop %v1847
        %v1850 = vsub.f32 1.0, %v1839
        %v1851 = vsub.f32 1.0, %v1843
        %v1852 = vmul.f32 %v1850, %v1848
        %v1853 = vmul.f32 %v1851, %v1849
        %v1854 = vmul.f32 %v1839, %v429
        %v1855 = vmul.f32 %v1843, %v430
        %v1856 = vadd.f32 %v1852, %v1854
        %v1857 = vadd.f32 %v1853, %v1855
        %v1858 = vpack.c.bf16 %v1103, %v1099
        %s1859 = scalar_lea.vmem %s9, 192
        %v1860 = vld [vmem:[%s1859] sm:$0xff]
        %v1861 = vld [vmem:[%s1859 + $0x8] sm:$0xf]
        %v1862 = vld [vmem:[%s1859 + $0xc] sm:$0xff]
        %v1863 = vld [vmem:[%s1859 + $0x14] sm:$0xf]
        %v1864 = vld [vmem:[%s1859 + $0x18] sm:$0xff]
        %v1865 = vld [vmem:[%s1859 + $0x20] sm:$0xf]
        %v1866 = vld [vmem:[%s1859 + $0x24] sm:$0xff]
        %v1867 = vld [vmem:[%s1859 + $0x2c] sm:$0xf]
        %v1868 = vld [vmem:[%s1859 + $0x30] sm:$0xff]
        %v1869 = vld [vmem:[%s1859 + $0x38] sm:$0xf]
        %v1870 = vld [vmem:[%s1859 + $0x3c] sm:$0xff]
        %v1871 = vld [vmem:[%s1859 + $0x44] sm:$0xf]
        %v1872 = vld [vmem:[%s1859 + $0x48] sm:$0xff]
        %v1873 = vld [vmem:[%s1859 + $0x50] sm:$0xf]
        %v1874 = vld [vmem:[%s1859 + $0x54] sm:$0xff]
        %v1875 = vld [vmem:[%s1859 + $0x5c] sm:$0xf]
        %v1876 = vld [vmem:[%s1859 + $0x60] sm:$0xff]
        %v1877 = vld [vmem:[%s1859 + $0x68] sm:$0xf]
        %v1878 = vld [vmem:[%s1859 + $0x6c] sm:$0xff]
        %v1879 = vld [vmem:[%s1859 + $0x74] sm:$0xf]
        %v1880 = vld [vmem:[%s1859 + $0x78] sm:$0xff]
        %v1881 = vld [vmem:[%s1859 + $0x80] sm:$0xf]
        %v1882 = vld [vmem:[%s1859 + $0x84] sm:$0xff]
        %v1883 = vld [vmem:[%s1859 + $0x8c] sm:$0xf]
        %v1884 = vld [vmem:[%s1859 + $0x90] sm:$0xff]
        %v1885 = vld [vmem:[%s1859 + $0x98] sm:$0xf]
        %v1886 = vld [vmem:[%s1859 + $0x9c] sm:$0xff]
        %v1887 = vld [vmem:[%s1859 + $0xa4] sm:$0xf]
        %v1888 = vld [vmem:[%s1859 + $0xa8] sm:$0xff]
        %v1889 = vld [vmem:[%s1859 + $0xb0] sm:$0xf]
        %v1890 = vld [vmem:[%s1859 + $0xb4] sm:$0xff]
        %v1891 = vld [vmem:[%s1859 + $0xbc] sm:$0xf]
        %s1892 = scalar_lea.vmem %s10, 3
        %v1893 = vld [vmem:[%s1892] sm:$0x7]
        %v1895 = vlaneseq
        %v1896 = vshrl.u32 %v1895, 7
        %v1897 = vsub.s32 0, %v1896
        %v1898 = vrot.slane %v1893, %v1897
        %v1899 = vlaneseq
        %v1900 = vshrl.u32 %v1899, 7
        %v1901 = vsub.s32 1, %v1900
        %v1902 = vrot.slane %v1893, %v1901
        %v1903 = vlaneseq
        %v1904 = vshrl.u32 %v1903, 7
        %v1905 = vsub.s32 2, %v1904
        %v1906 = vrot.slane %v1893, %v1905
        %v1942 = vunpack.c.l.b16 %v1860
        %v1943 = vunpack.c.h.b16 %v1860
        %v1944 = vunpack.c.l.b16 %v1861
        %v1945 = vunpack.c.l.b16 %v1862
        %v1946 = vunpack.c.h.b16 %v1862
        %v1947 = vunpack.c.l.b16 %v1863
        %v1948 = vunpack.c.l.b16 %v1864
        %v1949 = vunpack.c.h.b16 %v1864
        %v1950 = vunpack.c.l.b16 %v1865
        %v1951 = vunpack.c.l.b16 %v1866
        %v1952 = vunpack.c.h.b16 %v1866
        %v1953 = vunpack.c.l.b16 %v1867
        %v1954 = vunpack.c.l.b16 %v1868
        %v1955 = vunpack.c.h.b16 %v1868
        %v1956 = vunpack.c.l.b16 %v1869
        %v1957 = vunpack.c.l.b16 %v1870
        %v1958 = vunpack.c.h.b16 %v1870
        %v1959 = vunpack.c.l.b16 %v1871
        %v1960 = vunpack.c.l.b16 %v1872
        %v1961 = vunpack.c.h.b16 %v1872
        %v1962 = vunpack.c.l.b16 %v1873
        %v1963 = vunpack.c.l.b16 %v1874
        %v1964 = vunpack.c.h.b16 %v1874
        %v1965 = vunpack.c.l.b16 %v1875
        %v1966 = vunpack.c.l.b16 %v1876
        %v1967 = vunpack.c.h.b16 %v1876
        %v1968 = vunpack.c.l.b16 %v1877
        %v1969 = vunpack.c.l.b16 %v1878
        %v1970 = vunpack.c.h.b16 %v1878
        %v1971 = vunpack.c.l.b16 %v1879
        %v1972 = vunpack.c.l.b16 %v1880
        %v1973 = vunpack.c.h.b16 %v1880
        %v1974 = vunpack.c.l.b16 %v1881
        %v1975 = vunpack.c.l.b16 %v1882
        %v1976 = vunpack.c.h.b16 %v1882
        %v1977 = vunpack.c.l.b16 %v1883
        %v1978 = vunpack.c.l.b16 %v1884
        %v1979 = vunpack.c.h.b16 %v1884
        %v1980 = vunpack.c.l.b16 %v1885
        %v1981 = vunpack.c.l.b16 %v1886
        %v1982 = vunpack.c.h.b16 %v1886
        %v1983 = vunpack.c.l.b16 %v1887
        %v1984 = vunpack.c.l.b16 %v1888
        %v1985 = vunpack.c.h.b16 %v1888
        %v1986 = vunpack.c.l.b16 %v1889
        %v1987 = vunpack.c.l.b16 %v1890
        %v1988 = vunpack.c.h.b16 %v1890
        %v1989 = vunpack.c.l.b16 %v1891
        %v1990 = vpack.c.b16 %v1945, %v1942
        %v1991 = vpack.c.b16 %v1946, %v1943
        %v1992 = vpack.c.b16 %v1947, %v1944
        %v1993 = vpack.c.b16 %v1951, %v1948
        %v1994 = vpack.c.b16 %v1952, %v1949
        %v1995 = vpack.c.b16 %v1953, %v1950
        %v1996 = vpack.c.b16 %v1957, %v1954
        %v1997 = vpack.c.b16 %v1958, %v1955
        %v1998 = vpack.c.b16 %v1959, %v1956
        %v1999 = vpack.c.b16 %v1963, %v1960
        %v2000 = vpack.c.b16 %v1964, %v1961
        %v2001 = vpack.c.b16 %v1965, %v1962
        %v2002 = vpack.c.b16 %v1969, %v1966
        %v2003 = vpack.c.b16 %v1970, %v1967
        %v2004 = vpack.c.b16 %v1971, %v1968
        %v2005 = vpack.c.b16 %v1975, %v1972
        %v2006 = vpack.c.b16 %v1976, %v1973
        %v2007 = vpack.c.b16 %v1977, %v1974
        %v2008 = vpack.c.b16 %v1981, %v1978
        %v2009 = vpack.c.b16 %v1982, %v1979
        %v2010 = vpack.c.b16 %v1983, %v1980
        %v2011 = vpack.c.b16 %v1987, %v1984
        %v2012 = vpack.c.b16 %v1988, %v1985
        %v2013 = vpack.c.b16 %v1989, %v1986
        %2038 = vmatprep.subr.bf16.mxu0 %v2012
        %2039 = vmatpush1.bf16.msra.mxu0 %v2011
        %2040 = vmatprep.subr.bf16.mxu0 %v2009
        %2041 = vmatpush1.bf16.msra.mxu0 %v2008
        %2042 = vmatprep.subr.bf16.mxu0 %v2006
        %2043 = vmatpush1.bf16.msra.mxu0 %v2005
        %2044 = vmatprep.subr.bf16.mxu0 %v2003
        %2045 = vmatpush1.bf16.msra.mxu0 %v2002
        %2046 = vmatprep.subr.bf16.mxu0 %v2000
        %2047 = vmatpush1.bf16.msra.mxu0 %v1999
        %2048 = vmatprep.subr.bf16.mxu0 %v1997
        %2049 = vmatpush1.bf16.msra.mxu0 %v1996
        %2050 = vmatprep.subr.bf16.mxu0 %v1994
        %2051 = vmatpush1.bf16.msra.mxu0 %v1993
        %2052 = vmatprep.subr.bf16.mxu0 %v1991
        %2053 = vmatpush1.bf16.msra.mxu0 %v1990
        %2054 = vmatprep.subr.bf16.mxu0 0
        %2055 = vmatpush2.bf16.msra.mxu0 0
        %2056 = vmatprep.subr.bf16.mxu0 0
        %2057 = vmatpush2.bf16.msra.mxu0 0
        %2058 = vmatprep.subr.bf16.mxu0 0
        %2059 = vmatpush2.bf16.msra.mxu0 0
        %2060 = vmatprep.subr.bf16.mxu0 0
        %2061 = vmatpush2.bf16.msra.mxu0 0
        %2062 = vmatprep.subr.bf16.mxu0 0
        %2063 = vmatpush2.bf16.msra.mxu0 0
        %2064 = vmatprep.subr.bf16.mxu0 0
        %2065 = vmatpush2.bf16.msra.mxu0 0
        %2066 = vmatprep.subr.bf16.mxu0 0
        %2067 = vmatpush2.bf16.msra.mxu0 0
        %2068 = vmatprep.subr.bf16.mxu0 0
        %2069 = vmatpush2.bf16.msra.mxu0 0
        %2070 = vmatprep.mubr.bf16.mxu0 0
        %2071 = vmatmul.mubr.bf16.gmra.mxu0 %v1858
        %v2072 = vpop.f32.mrf.mxu0
        %v2073 = vadd.f32 %v1898, %v2072
        %v2074 = vpop.f32.mrf.mxu0
        %v2075 = vadd.f32 %v1902, %v2074
        %v2076 = vpop.f32.mrf.mxu0
        %v2077 = vadd.f32 %v1898, %v2076
        %v2078 = vpop.f32.mrf.mxu0
        %v2079 = vadd.f32 %v1902, %v2078
        %2080 = vdwg.mxu0
        %2081 = vmatprep.subr.bf16.mxu0 0
        %2082 = vmatpush1.bf16.msra.mxu0 %v2013
        %2083 = vmatprep.subr.bf16.mxu0 0
        %2084 = vmatpush1.bf16.msra.mxu0 %v2010
        %2085 = vmatprep.subr.bf16.mxu0 0
        %2086 = vmatpush1.bf16.msra.mxu0 %v2007
        %2087 = vmatprep.subr.bf16.mxu0 0
        %2088 = vmatpush1.bf16.msra.mxu0 %v2004
        %2089 = vmatprep.subr.bf16.mxu0 0
        %2090 = vmatpush1.bf16.msra.mxu0 %v2001
        %2091 = vmatprep.subr.bf16.mxu0 0
        %2092 = vmatpush1.bf16.msra.mxu0 %v1998
        %2093 = vmatprep.subr.bf16.mxu0 0
        %2094 = vmatpush1.bf16.msra.mxu0 %v1995
        %2095 = vmatprep.subr.bf16.mxu0 0
        %2096 = vmatpush1.bf16.msra.mxu0 %v1992
        %2097 = vmatprep.subr.bf16.mxu0 0
        %2098 = vmatpush2.bf16.msra.mxu0 0
        %2099 = vmatprep.subr.bf16.mxu0 0
        %2100 = vmatpush2.bf16.msra.mxu0 0
        %2101 = vmatprep.subr.bf16.mxu0 0
        %2102 = vmatpush2.bf16.msra.mxu0 0
        %2103 = vmatprep.subr.bf16.mxu0 0
        %2104 = vmatpush2.bf16.msra.mxu0 0
        %2105 = vmatprep.subr.bf16.mxu0 0
        %2106 = vmatpush2.bf16.msra.mxu0 0
        %2107 = vmatprep.subr.bf16.mxu0 0
        %2108 = vmatpush2.bf16.msra.mxu0 0
        %2109 = vmatprep.subr.bf16.mxu0 0
        %2110 = vmatpush2.bf16.msra.mxu0 0
        %2111 = vmatprep.subr.bf16.mxu0 0
        %2112 = vmatpush2.bf16.msra.mxu0 0
        %2113 = vmatprep.mubr.bf16.mxu0 0
        %2114 = vmatmul.mubr.bf16.gmra.mxu0 %v1858
        %v2115 = vpop.f32.mrf.mxu0
        %v2116 = vadd.f32 %v1906, %v2115
        %v2117 = vpop.f32.mrf.mxu0
        %v2118 = vpop.f32.mrf.mxu0
        %v2119 = vadd.f32 %v1906, %v2118
        %v2120 = vpop.f32.mrf.mxu0
        %2121 = vdwg.mxu0
        %v2122 = vadd.f32 %v2073, %v1505
        %v2123 = vadd.f32 %v2075, %v1546
        %v2124 = vadd.f32 %v2077, %v1509
        %v2125 = vadd.f32 %v2079, %v1550
        %v2126 = vxor.u32 %v2122, 2147483648
        %v2127 = vxor.u32 %v2123, 2147483648
        %v2128 = vxor.u32 %v2124, 2147483648
        %v2129 = vxor.u32 %v2125, 2147483648
        %v2130 = vmul.f32 %v2126, 1.442695
        %v2131 = vpow.pop %v2130
        %v2132 = vmul.f32 %v2127, 1.442695
        %v2133 = vpow.pop %v2132
        %v2134 = vmul.f32 %v2128, 1.442695
        %v2135 = vpow.pop %v2134
        %v2136 = vmul.f32 %v2129, 1.442695
        %v2137 = vpow.pop %v2136
        %v2138 = vadd.f32 %v2131, 1.0
        %v2139 = vadd.f32 %v2133, 1.0
        %v2140 = vadd.f32 %v2135, 1.0
        %v2141 = vadd.f32 %v2137, 1.0
        %v2142 = vrcp.pop %v2138
        %v2143 = vmul.f32 1.0, %v2142
        %v2144 = vrcp.pop %v2139
        %v2145 = vmul.f32 1.0, %v2144
        %v2146 = vrcp.pop %v2140
        %v2147 = vmul.f32 1.0, %v2146
        %v2148 = vrcp.pop %v2141
        %v2149 = vmul.f32 1.0, %v2148
        %v2150 = vmul.f32 %v2143, %v1548
        %v2151 = vmul.f32 %v2147, %v1552
        %v2152 = vadd.f32 %v2116, %v2150
        %v2153 = vadd.f32 %v2119, %v2151
        %v2154 = vtanh.pop %v2152
        %v2155 = vtanh.pop %v2153
        %v2156 = vsub.f32 1.0, %v2145
        %v2157 = vsub.f32 1.0, %v2149
        %v2158 = vmul.f32 %v2156, %v2154
        %v2159 = vmul.f32 %v2157, %v2155
        %v2160 = vmul.f32 %v2145, %v429
        %v2161 = vmul.f32 %v2149, %v430
        %v2162 = vadd.f32 %v2158, %v2160
        %v2163 = vadd.f32 %v2159, %v2161
        %v2164 = vstv %s428
        %vm2165 = vcmp.eq.s32.totalorder %v432, %v2164
        %vm2166 = vcmp.eq.s32.totalorder %v433, %v2164
        %vm2167 = vcmp.eq.s32.totalorder %v434, 1
        %vm2168 = vcmp.eq.s32.totalorder %v435, 1
        %vm2169 = vmand %vm2165, %vm2167
        %vm2170 = vmand %vm2166, %vm2168
        %vm2171 = vcmp.eq.s32.totalorder %v434, 2
        %vm2172 = vcmp.eq.s32.totalorder %v435, 2
        %vm2173 = vmand %vm2165, %vm2171
        %vm2174 = vmand %vm2166, %vm2172
        %v2175 = vsel %vm2173, 1, 0
        %v2176 = vsel %vm2174, 1, 0
        %2177 = vset.pattern.permute.xlu0 0
        %2178 = vperm.xlu0 %2177, %v2175
        %v2179 = vpop.permute.xlu0 %2178
        %2180 = vset.pattern.permute.xlu0 0
        %2181 = vperm.xlu0 %2180, %v2176
        %v2182 = vpop.permute.xlu0 %2181
        %vm2183 = vcmp.eq.s32.totalorder %v2179, 1
        %vm2184 = vcmp.eq.s32.totalorder %v2182, 1
        %v2185 = vsel %vm2183, %v2162, %v429
        %v2186 = vsel %vm2184, %v2163, %v430
        %v2187 = vsel %vm2169, 1, 0
        %v2188 = vsel %vm2170, 1, 0
        %2189 = vset.pattern.permute.xlu0 0
        %2190 = vperm.xlu0 %2189, %v2187
        %v2191 = vpop.permute.xlu0 %2190
        %2192 = vset.pattern.permute.xlu0 0
        %2193 = vperm.xlu0 %2192, %v2188
        %v2194 = vpop.permute.xlu0 %2193
        %vm2195 = vcmp.eq.s32.totalorder %v2191, 1
        %vm2196 = vcmp.eq.s32.totalorder %v2194, 1
        %v2197 = vsel %vm2195, %v1856, %v2185
        %v2198 = vsel %vm2196, %v1857, %v2186
        %2199 = vst [vmem:[#allocation2] sm:$0xff] %v2197
        %2200 = vst [vmem:[#allocation2 + $0x8] sm:$0xff] %v2198
        // Predicated region
        $region77: #{model_forward.3} parent=71 // pred_check
          %p2201 = pneg %p323
        $region78: #{model_forward.3} parent=71 // pred_check_branch
          %2203 = sbr.rel (%p2201) target = $region80
        $region79: #{model_forward.3} parent=71 // pred_region
          %s2205 = ssub.s32 256, 256
          %2206 = vsyncadd [#allocation3], %s2205
          %s2207 = sshll.u32 [#allocation2], 4
          %s2208 = int_to_ptr.vmem [resolvable:$true] %s2207
          %2213 = dma.vmem_to_hbm [thread:$0]  %s2208, 256, %s13, [#allocation3], 128, 128, 8
        $region80: #{model_forward.3} parent=71 // pred_fallthru
          _
        // Predicated region
        $region81: #{model_forward.3} parent=71 // pred_check
          %p2214 = pneg %p323
        $region82: #{model_forward.3} parent=71 // pred_check_branch
          %2216 = sbr.rel (%p2214) target = $region84
        $region83: #{model_forward.3} parent=71 // pred_region
          %2217 = dma.done [#allocation3], 256
        $region84: #{model_forward.3} parent=71 // pred_fallthru
          _
      $region72: #{model_forward.3} parent=5 // pred_fallthru
        _
      %p2218 = scmp.le.s32.totalorder 2, %s20
      // Predicated region
      $region85: #{model_forward.3} parent=5 // pred_check
        %p2219 = pneg %p2218
      $region86: #{model_forward.3} parent=5 // pred_check_branch
        %2221 = sbr.rel (%p2219) target = $region88
      $region87: #{model_forward.3} parent=5 // pred_region
        %s2222 = ssub.s32 %s20, 2
      $region88: #{model_forward.3} parent=5 // pred_fallthru
        _
    $region6: #{model_forward.3} parent=1 // loop_footer
      %s24 = sadd.s32 1, %s20
    $region7: #{model_forward.3} parent=1 // loop_footer_branch
      %19 = sbr.rel target = $region3
    $region8: #{model_forward.3} parent=1 // loop_exit
      _
    %2223 = vsyncpa [#allocation3], 1
    %s2224 = scalar_lea.sflag [#allocation3], 1
    %2225 = vsyncpa %s2224, 1

</llo_original>
